<compile_context>
chip_gen: v5e
topology: v5e:2x2
jax: 0.10.0
libtpu: 0.0.40
codegen_flags: <defaults>
</compile_context>

<pallas_src>
import functools

import jax
import jax.numpy as jnp
from jax.experimental import pallas as pl
from jax.experimental.pallas import tpu as pltpu


# ---------------------------------------------------------------------------
# Pallas kernel: d^T[b, c, i] = sum_j s[b, i, j] * P_tgt[b, j, c] - P_src[b, i, c]
# ---------------------------------------------------------------------------
def _displacement_kernel(s_ref, p_src_t_ref, p_tgt_t_ref, d_t_ref):
    # s_ref      : (TB, TM, N2)
    # p_src_t_ref: (TB, 2, TM)     (coordinates on sublanes, rows on lanes)
    # p_tgt_t_ref: (TB, 2, N2)
    # d_t_ref    : (TB, 2, TM)     lane-dense output (TM >= 128 or TM == n1)
    s = s_ref[...].astype(jnp.float32)
    p_src_t = p_src_t_ref[...].astype(jnp.float32)
    p_tgt_t = p_tgt_t_ref[...].astype(jnp.float32)

    for c in range(2):  # two coordinates, fully unrolled
        pt_c = p_tgt_t[:, c, :]                               # (TB, N2)
        # VPU multiply + XLU lane-axis reduce; exact f32 accumulation.
        acc = jnp.sum(s * pt_c[:, None, :], axis=-1)          # (TB, TM)
        d_t_ref[:, c, :] = (acc - p_src_t[:, c, :]).astype(d_t_ref.dtype)


# ---------------------------------------------------------------------------
# Tiling choice: biggest s block (~2 MiB) that divides (b, n1) and keeps the
# output block lane-dense (TM multiple of 128 or TM == n1).
# ---------------------------------------------------------------------------
_BYTES_TARGET = 2 << 20  # ~85%+ of HBM roofline per measured tile sweep


def _choose_tiles(b, n1, n2, itemsize):
    batch_bytes = n1 * n2 * itemsize
    if batch_bytes <= _BYTES_TARGET:
        # Whole (n1, n2) slab per batch fits; pack several batches per step.
        tm = n1
        cap = min(b, max(1, _BYTES_TARGET // batch_bytes))
        tb = next(c for c in range(cap, 0, -1) if b % c == 0)
        return tb, tm
    # Single batch is already big: tile rows of n1 in multiples of 128.
    tb = 1
    cap_rows = max(128, (_BYTES_TARGET // (n2 * itemsize)) // 128 * 128)
    divisors = [m for m in range(128, n1 + 1, 128) if n1 % m == 0 and m <= cap_rows]
    tm = max(divisors) if divisors else None  # None -> XLA fallback
    return tb, tm


# ---------------------------------------------------------------------------
# Wrappers
# ---------------------------------------------------------------------------
@functools.partial(jax.jit, static_argnames=("tb", "tm"))
def _displacement_pallas(s, p_src, p_tgt, *, tb, tm):
    b, n1, n2 = s.shape
    # Tiny transposes (b*n*2 elements) so the kernel sees lane-dense layouts.
    p_src_t = jnp.swapaxes(p_src, 1, 2)  # (b, 2, n1)
    p_tgt_t = jnp.swapaxes(p_tgt, 1, 2)  # (b, 2, n2)

    d_t = pl.pallas_call(
        _displacement_kernel,
        out_shape=jax.ShapeDtypeStruct((b, 2, n1), s.dtype),
        grid=(b // tb, n1 // tm),
        in_specs=[
            pl.BlockSpec((tb, tm, n2), lambda i, j: (i, j, 0)),
            pl.BlockSpec((tb, 2, tm), lambda i, j: (i, 0, j)),
            pl.BlockSpec((tb, 2, n2), lambda i, j: (i, 0, 0)),
        ],
        out_specs=pl.BlockSpec((tb, 2, tm), lambda i, j: (i, 0, j)),
        compiler_params=pltpu.CompilerParams(
            dimension_semantics=("parallel", "parallel"),
            vmem_limit_bytes=32 << 20,
        ),
    )(s, p_src_t, p_tgt_t)
    return jnp.swapaxes(d_t, 1, 2)  # (b, n1, 2)


@jax.jit
def _displacement_xla(s, p_src, p_tgt):
    # Fused XLA path for tiny / oddly-shaped problems where pallas_call fixed
    # cost dominates. HIGHEST precision ~= true f32 matmul (torch semantics).
    return (
        jnp.einsum("bij,bjk->bik", s, p_tgt, precision=jax.lax.Precision.HIGHEST)
        - p_src
    )


_MIN_PALLAS_ELEMS = 128 * 128  # below this, fused XLA wins outright


def displacement(s, P_src, P_tgt, ns_gt=None):
    """JAX/Pallas equivalent of Displacement.forward."""
    b, n1, n2 = s.shape

    if ns_gt is None:
        P_src_used = P_src[:, :n1, :]
        grad_mask = None
    else:
        ns = jnp.asarray(ns_gt, dtype=jnp.int32)
        rows = jnp.arange(P_src.shape[1], dtype=jnp.int32)
        grad_mask = jnp.broadcast_to(
            rows[None, :, None] < ns[:, None, None], P_src.shape
        ).astype(P_src.dtype)
        P_src_used = P_src  # PyTorch does not truncate in this branch

    tb, tm = _choose_tiles(b, n1, n2, jnp.dtype(s.dtype).itemsize)
    if tm is not None and n1 * n2 >= _MIN_PALLAS_ELEMS:
        d = _displacement_pallas(s, P_src_used, P_tgt, tb=tb, tm=tm)
    else:
        d = _displacement_xla(s, P_src_used, P_tgt)
    return d, grad_mask


# ---------------------------------------------------------------------------
# Self-test
# ---------------------------------------------------------------------------
if __name__ == "__main__":
    key = jax.random.PRNGKey(0)
    k1, k2, k3 = jax.random.split(key, 3)

    # Pallas path: multiple batches packed into one grid step, lane-dense out.
    b, n1, n2 = 4, 128, 128
    s = jax.nn.softmax(jax.random.normal(k1, (b, n1, n2), dtype=jnp.float32), axis=-1)
    P_src = jax.random.normal(k2, (b, n1, 2), dtype=jnp.float32)
    P_tgt = jax.random.normal(k3, (b, n2, 2), dtype=jnp.float32)
    ns_gt = jnp.array([100, 128, 64, 1], dtype=jnp.int32)

    d, grad_mask = displacement(s, P_src, P_tgt, ns_gt)
    d = jax.block_until_ready(d)
    grad_mask = jax.block_until_ready(grad_mask)

    # Exact-f32 reference (elementwise multiply + sum, no MXU precision issues).
    d_ref = jnp.sum(s[:, :, :, None] * P_tgt[:, None, :, :], axis=2) - P_src
    mask_ref = jnp.broadcast_to(
        jnp.arange(n1)[None, :, None] < ns_gt[:, None, None], P_src.shape
    ).astype(P_src.dtype)

    assert d.shape == (b, n1, 2)
    assert jnp.allclose(d, d_ref, atol=1e-5, rtol=1e-5), "displacement mismatch (pallas)"
    assert jnp.allclose(grad_mask, mask_ref), "grad_mask mismatch"

    # ns_gt=None: grad_mask must be None, d unchanged.
    d2, gm2 = displacement(s, P_src, P_tgt, None)
    d2 = jax.block_until_ready(d2)
    assert gm2 is None
    assert jnp.allclose(d2, d_ref, atol=1e-5, rtol=1e-5), "displacement mismatch (ns_gt=None)"

    # Tiny problem exercises the fused-XLA fallback dispatch.
    bs, m1, m2 = 2, 8, 8
    ss = jax.nn.softmax(jax.random.normal(k1, (bs, m1, m2), dtype=jnp.float32), axis=-1)
    Ps = jax.random.normal(k2, (bs, m1, 2), dtype=jnp.float32)
    Pt = jax.random.normal(k3, (bs, m2, 2), dtype=jnp.float32)
    d3, gm3 = displacement(ss, Ps, Pt, jnp.array([6, 8], dtype=jnp.int32))
    d3 = jax.block_until_ready(d3)
    d3_ref = jnp.sum(ss[:, :, :, None] * Pt[:, None, :, :], axis=2) - Ps
    gm3_ref = jnp.broadcast_to(
        jnp.arange(m1)[None, :, None] < jnp.array([6, 8])[:, None, None], Ps.shape
    ).astype(Ps.dtype)
    assert jnp.allclose(d3, d3_ref, atol=1e-4, rtol=1e-4), "displacement mismatch (fallback)"
    assert jnp.allclose(gm3, gm3_ref), "grad_mask mismatch (fallback)"

    print("KERNEL_OK")
</pallas_src>

<mosaic_0001>
module attributes {stable_mosaic.version = 11 : i64} {
  func.func @_displacement_kernel(%arg0: i32, %arg1: i32, %arg2: memref<4x128x128xf32, #tpu.memory_space<vmem>>, %arg3: memref<4x2x128xf32, #tpu.memory_space<vmem>>, %arg4: memref<4x2x128xf32, #tpu.memory_space<vmem>>, %arg5: memref<4x2x128xf32, #tpu.memory_space<vmem>>) attributes {dimension_semantics = [#tpu.dimension_semantics<parallel>, #tpu.dimension_semantics<parallel>], iteration_bounds = array<i64: 1, 1>, scalar_prefetch = 0 : i64, scratch_operands = 0 : i64, tpu.core_type = #tpu.core_type<tc>, window_params = [{transform_indices = @transform_0, window_bounds = array<i64: 4, 128, 128>}, {transform_indices = @transform_1, window_bounds = array<i64: 4, 2, 128>}, {transform_indices = @transform_2, window_bounds = array<i64: 4, 2, 128>}, {transform_indices = @transform_3, window_bounds = array<i64: 4, 2, 128>}]} {
    %c0 = arith.constant 0 : index
    %c0_0 = arith.constant 0 : index
    %c0_1 = arith.constant 0 : index
    %0 = vector.load %arg2[%c0, %c0_0, %c0_1] : memref<4x128x128xf32, #tpu.memory_space<vmem>>, vector<4x128x128xf32>
    %c0_2 = arith.constant 0 : index
    %c0_3 = arith.constant 0 : index
    %c0_4 = arith.constant 0 : index
    %1 = vector.load %arg3[%c0_2, %c0_3, %c0_4] : memref<4x2x128xf32, #tpu.memory_space<vmem>>, vector<4x2x128xf32>
    %c0_5 = arith.constant 0 : index
    %c0_6 = arith.constant 0 : index
    %c0_7 = arith.constant 0 : index
    %2 = vector.load %arg4[%c0_5, %c0_6, %c0_7] : memref<4x2x128xf32, #tpu.memory_space<vmem>>, vector<4x2x128xf32>
    %3 = vector.extract_strided_slice %2 {offsets = [0, 0, 0], sizes = [4, 1, 128], strides = [1, 1, 1]} : vector<4x2x128xf32> to vector<4x1x128xf32>
    %4 = vector.shape_cast %3 : vector<4x1x128xf32> to vector<4x128xf32>
    %5 = vector.shape_cast %4 : vector<4x128xf32> to vector<4x1x128xf32>
    %6 = vector.broadcast %5 : vector<4x1x128xf32> to vector<4x128x128xf32>
    %7 = arith.mulf %0, %6 : vector<4x128x128xf32>
    %cst = arith.constant dense<0.000000e+00> : vector<4x128xf32>
    %8 = vector.multi_reduction <add>, %7, %cst [2] : vector<4x128x128xf32> to vector<4x128xf32>
    %9 = vector.extract_strided_slice %1 {offsets = [0, 0, 0], sizes = [4, 1, 128], strides = [1, 1, 1]} : vector<4x2x128xf32> to vector<4x1x128xf32>
    %10 = vector.shape_cast %9 : vector<4x1x128xf32> to vector<4x128xf32>
    %11 = arith.subf %8, %10 : vector<4x128xf32>
    %c0_8 = arith.constant 0 : index
    %c0_9 = arith.constant 0 : index
    %c0_10 = arith.constant 0 : index
    %12 = vector.load %arg5[%c0_8, %c0_9, %c0_10] : memref<4x2x128xf32, #tpu.memory_space<vmem>>, vector<4x1x128xf32>
    %13 = vector.shape_cast %12 : vector<4x1x128xf32> to vector<4x128xf32>
    %14 = vector.shape_cast %11 : vector<4x128xf32> to vector<4x1x128xf32>
    tpu.vector_store %arg5[%c0_8, %c0_9, %c0_10], %14 {strides = array<i32>} : memref<4x2x128xf32, #tpu.memory_space<vmem>>, vector<4x1x128xf32>,
    %15 = vector.extract_strided_slice %2 {offsets = [0, 1, 0], sizes = [4, 1, 128], strides = [1, 1, 1]} : vector<4x2x128xf32> to vector<4x1x128xf32>
    %16 = vector.shape_cast %15 : vector<4x1x128xf32> to vector<4x128xf32>
    %17 = vector.shape_cast %16 : vector<4x128xf32> to vector<4x1x128xf32>
    %18 = vector.broadcast %17 : vector<4x1x128xf32> to vector<4x128x128xf32>
    %19 = arith.mulf %0, %18 : vector<4x128x128xf32>
    %cst_11 = arith.constant dense<0.000000e+00> : vector<4x128xf32>
    %20 = vector.multi_reduction <add>, %19, %cst_11 [2] : vector<4x128x128xf32> to vector<4x128xf32>
    %21 = vector.extract_strided_slice %1 {offsets = [0, 1, 0], sizes = [4, 1, 128], strides = [1, 1, 1]} : vector<4x2x128xf32> to vector<4x1x128xf32>
    %22 = vector.shape_cast %21 : vector<4x1x128xf32> to vector<4x128xf32>
    %23 = arith.subf %20, %22 : vector<4x128xf32>
    %c0_12 = arith.constant 0 : index
    %c1 = arith.constant 1 : index
    %c0_13 = arith.constant 0 : index
    %24 = vector.load %arg5[%c0_12, %c1, %c0_13] : memref<4x2x128xf32, #tpu.memory_space<vmem>>, vector<4x1x128xf32>
    %25 = vector.shape_cast %24 : vector<4x1x128xf32> to vector<4x128xf32>
    %26 = vector.shape_cast %23 : vector<4x128xf32> to vector<4x1x128xf32>
    tpu.vector_store %arg5[%c0_12, %c1, %c0_13], %26 {strides = array<i32>} : memref<4x2x128xf32, #tpu.memory_space<vmem>>, vector<4x1x128xf32>,
    return
  }
  func.func @transform_0(%arg0: i32, %arg1: i32) -> (i32, i32, i32) {
    %c0_i32 = arith.constant 0 : i32
    %c0_i32_0 = arith.constant 0 : i32
    return %arg0, %arg1, %c0_i32 : i32, i32, i32
  }
  func.func @transform_1(%arg0: i32, %arg1: i32) -> (i32, i32, i32) {
    %c0_i32 = arith.constant 0 : i32
    %c0_i32_0 = arith.constant 0 : i32
    return %arg0, %c0_i32, %arg1 : i32, i32, i32
  }
  func.func @transform_2(%arg0: i32, %arg1: i32) -> (i32, i32, i32) {
    %c0_i32 = arith.constant 0 : i32
    %c0_i32_0 = arith.constant 0 : i32
    %c0_i32_1 = arith.constant 0 : i32
    return %arg0, %c0_i32, %c0_i32_0 : i32, i32, i32
  }
  func.func @transform_3(%arg0: i32, %arg1: i32) -> (i32, i32, i32) {
    %c0_i32 = arith.constant 0 : i32
    %c0_i32_0 = arith.constant 0 : i32
    return %arg0, %c0_i32, %arg1 : i32, i32, i32
  }
}

</mosaic_0001>

<llo_original>
// kernel: _displacement_pallas.1
$region0: #{_displacement_pallas.1}
  #allocation0 [shape = 'u32[]', space=smem, size = 0x4, offset = 0x4, fixed_abs, tag = 'smem constant byte address 0x4 - core index']
  #allocation1 [shape = 'u32[72,128]{1,0:T(1,128)}', space=vmem, size = 0x9000, scoped, tag = 'internal scratch']
  %s0 = inlined_call_operand.hbm [shape: f32[4,128,128], index: 0, kind: input, shape index: {}]
  %s1 = inlined_call_operand.hbm [shape: f32[4,2,128], index: 1, kind: input, shape index: {}]
  %s2 = inlined_call_operand.hbm [shape: f32[4,2,128], index: 2, kind: input, shape index: {}]
  %s3 = inlined_call_operand.hbm [shape: f32[4,2,128], index: 3, kind: output, shape index: {}]
  %s4 = sld [smem:[#allocation0]]
  $region34: #{_displacement_pallas.1} parent=0
    _
  %s6 = ssub.s32 1, %s4
  %s7 = scalar_select 0, %s6, %s4
  $region1: #{_displacement_pallas.1} parent=0
    #allocation2 [shape = 'u8[262144]{0}', space=vmem, size = 0x40000, scoped, tag = 'input window, operand 0, single buffered']
    #allocation3 [shape = 's32[1]{0}', space=sflag, size = 0x4, scoped, tag = 'scoped memory for _displacement_pallas.1']
    #allocation4 [shape = 's32[1]{0}', space=sflag, size = 0x4, scoped, tag = 'scoped memory for _displacement_pallas.1']
    #allocation5 [shape = 'u8[4096]{0}', space=vmem, size = 0x1000, scoped, tag = 'input window, operand 1, single buffered']
    #allocation6 [shape = 's32[1]{0}', space=sflag, size = 0x4, scoped, tag = 'scoped memory for _displacement_pallas.1']
    #allocation7 [shape = 'u8[4096]{0}', space=vmem, size = 0x1000, scoped, tag = 'input window, operand 2, single buffered']
    #allocation8 [shape = 'u8[4096]{0}', space=vmem, size = 0x1000, scoped, tag = 'output window, operand 0, single buffered']
    %8 = vsyncpa [#allocation3], 0
    %9 = vsyncpa [#allocation6], 0
    %10 = vsyncpa [#allocation4], 0
    // Predicated region
    $region2: #{_displacement_pallas.1} parent=1 // pred_check
      _
    $region3: #{_displacement_pallas.1} parent=1 // pred_check_branch
      %12 = sbr.rel (0) target = $region5
    $region4: #{_displacement_pallas.1} parent=1 // pred_region
      %14 = vsyncadd [#allocation3], 0
      %s15 = sshll.u32 %s0, 4
      %s16 = int_to_ptr.hbm [resolvable:$true] %s15
      %s17 = sshll.u32 [#allocation2], 4
      %s18 = int_to_ptr.vmem [resolvable:$true] %s17
      %23 = dma.hbm_to_vmem [thread:$0]  %s16, 8192, %s18, [#allocation3], 128, 128, 8
    $region5: #{_displacement_pallas.1} parent=1 // pred_fallthru
      _
    // Predicated region
    $region6: #{_displacement_pallas.1} parent=1 // pred_check
      _
    $region7: #{_displacement_pallas.1} parent=1 // pred_check_branch
      %25 = sbr.rel (0) target = $region9
    $region8: #{_displacement_pallas.1} parent=1 // pred_region
      %27 = vsyncadd [#allocation6], 0
      %s28 = sshll.u32 %s1, 4
      %s29 = int_to_ptr.hbm [resolvable:$true] %s28
      %s30 = sshll.u32 [#allocation5], 4
      %s31 = int_to_ptr.vmem [resolvable:$true] %s30
      %36 = dma.hbm_to_vmem [thread:$0]  %s29, 128, %s31, [#allocation6], 32, 32, 2
    $region9: #{_displacement_pallas.1} parent=1 // pred_fallthru
      _
    // Predicated region
    $region10: #{_displacement_pallas.1} parent=1 // pred_check
      _
    $region11: #{_displacement_pallas.1} parent=1 // pred_check_branch
      %38 = sbr.rel (0) target = $region13
    $region12: #{_displacement_pallas.1} parent=1 // pred_region
      %40 = vsyncadd [#allocation6], 0
      %s41 = sshll.u32 %s2, 4
      %s42 = int_to_ptr.hbm [resolvable:$true] %s41
      %s43 = sshll.u32 [#allocation7], 4
      %s44 = int_to_ptr.vmem [resolvable:$true] %s43
      %49 = dma.hbm_to_vmem [thread:$0]  %s42, 128, %s44, [#allocation6], 32, 32, 2
    $region13: #{_displacement_pallas.1} parent=1 // pred_fallthru
      _
    // Predicated region
    $region14: #{_displacement_pallas.1} parent=1 // pred_check
      _
    $region15: #{_displacement_pallas.1} parent=1 // pred_check_branch
      %51 = sbr.rel (0) target = $region17
    $region16: #{_displacement_pallas.1} parent=1 // pred_region
      %53 = dma.done [#allocation3], 8192
    $region17: #{_displacement_pallas.1} parent=1 // pred_fallthru
      _
    // Predicated region
    $region18: #{_displacement_pallas.1} parent=1 // pred_check
      _
    $region19: #{_displacement_pallas.1} parent=1 // pred_check_branch
      %55 = sbr.rel (0) target = $region21
    $region20: #{_displacement_pallas.1} parent=1 // pred_region
      %57 = dma.done [#allocation6], 128
    $region21: #{_displacement_pallas.1} parent=1 // pred_fallthru
      _
    // Predicated region
    $region22: #{_displacement_pallas.1} parent=1 // pred_check
      _
    $region23: #{_displacement_pallas.1} parent=1 // pred_check_branch
      %59 = sbr.rel (0) target = $region25
    $region24: #{_displacement_pallas.1} parent=1 // pred_region
      %61 = dma.done [#allocation6], 128
    $region25: #{_displacement_pallas.1} parent=1 // pred_fallthru
      _
    %v62 = vld [vmem:[#allocation2] sm:$0xff]
    %v63 = vld [vmem:[#allocation2 + $0x8] sm:$0xff]
    %v64 = vld [vmem:[#allocation2 + $0x10] sm:$0xff]
    %v65 = vld [vmem:[#allocation2 + $0x18] sm:$0xff]
    %v66 = vld [vmem:[#allocation2 + $0x20] sm:$0xff]
    %v67 = vld [vmem:[#allocation2 + $0x28] sm:$0xff]
    %v68 = vld [vmem:[#allocation2 + $0x30] sm:$0xff]
    %v69 = vld [vmem:[#allocation2 + $0x38] sm:$0xff]
    %v70 = vld [vmem:[#allocation2 + $0x40] sm:$0xff]
    %v71 = vld [vmem:[#allocation2 + $0x48] sm:$0xff]
    %v72 = vld [vmem:[#allocation2 + $0x50] sm:$0xff]
    %v73 = vld [vmem:[#allocation2 + $0x58] sm:$0xff]
    %v74 = vld [vmem:[#allocation2 + $0x60] sm:$0xff]
    %v75 = vld [vmem:[#allocation2 + $0x68] sm:$0xff]
    %v76 = vld [vmem:[#allocation2 + $0x70] sm:$0xff]
    %v77 = vld [vmem:[#allocation2 + $0x78] sm:$0xff]
    %v78 = vld [vmem:[#allocation2 + $0x80] sm:$0xff]
    %v79 = vld [vmem:[#allocation2 + $0x88] sm:$0xff]
    %v80 = vld [vmem:[#allocation2 + $0x90] sm:$0xff]
    %v81 = vld [vmem:[#allocation2 + $0x98] sm:$0xff]
    %v82 = vld [vmem:[#allocation2 + $0xa0] sm:$0xff]
    %v83 = vld [vmem:[#allocation2 + $0xa8] sm:$0xff]
    %v84 = vld [vmem:[#allocation2 + $0xb0] sm:$0xff]
    %v85 = vld [vmem:[#allocation2 + $0xb8] sm:$0xff]
    %v86 = vld [vmem:[#allocation2 + $0xc0] sm:$0xff]
    %v87 = vld [vmem:[#allocation2 + $0xc8] sm:$0xff]
    %v88 = vld [vmem:[#allocation2 + $0xd0] sm:$0xff]
    %v89 = vld [vmem:[#allocation2 + $0xd8] sm:$0xff]
    %v90 = vld [vmem:[#allocation2 + $0xe0] sm:$0xff]
    %v91 = vld [vmem:[#allocation2 + $0xe8] sm:$0xff]
    %v92 = vld [vmem:[#allocation2 + $0xf0] sm:$0xff]
    %v93 = vld [vmem:[#allocation2 + $0xf8] sm:$0xff]
    %v94 = vld [vmem:[#allocation2 + $0x100] sm:$0xff]
    %v95 = vld [vmem:[#allocation2 + $0x108] sm:$0xff]
    %v96 = vld [vmem:[#allocation2 + $0x110] sm:$0xff]
    %v97 = vld [vmem:[#allocation2 + $0x118] sm:$0xff]
    %v98 = vld [vmem:[#allocation2 + $0x120] sm:$0xff]
    %v99 = vld [vmem:[#allocation2 + $0x128] sm:$0xff]
    %v100 = vld [vmem:[#allocation2 + $0x130] sm:$0xff]
    %v101 = vld [vmem:[#allocation2 + $0x138] sm:$0xff]
    %v102 = vld [vmem:[#allocation2 + $0x140] sm:$0xff]
    %v103 = vld [vmem:[#allocation2 + $0x148] sm:$0xff]
    %v104 = vld [vmem:[#allocation2 + $0x150] sm:$0xff]
    %v105 = vld [vmem:[#allocation2 + $0x158] sm:$0xff]
    %v106 = vld [vmem:[#allocation2 + $0x160] sm:$0xff]
    %v107 = vld [vmem:[#allocation2 + $0x168] sm:$0xff]
    %v108 = vld [vmem:[#allocation2 + $0x170] sm:$0xff]
    %v109 = vld [vmem:[#allocation2 + $0x178] sm:$0xff]
    %v110 = vld [vmem:[#allocation2 + $0x180] sm:$0xff]
    %v111 = vld [vmem:[#allocation2 + $0x188] sm:$0xff]
    %v112 = vld [vmem:[#allocation2 + $0x190] sm:$0xff]
    %v113 = vld [vmem:[#allocation2 + $0x198] sm:$0xff]
    %v114 = vld [vmem:[#allocation2 + $0x1a0] sm:$0xff]
    %v115 = vld [vmem:[#allocation2 + $0x1a8] sm:$0xff]
    %v116 = vld [vmem:[#allocation2 + $0x1b0] sm:$0xff]
    %v117 = vld [vmem:[#allocation2 + $0x1b8] sm:$0xff]
    %v118 = vld [vmem:[#allocation2 + $0x1c0] sm:$0xff]
    %v119 = vld [vmem:[#allocation2 + $0x1c8] sm:$0xff]
    %v120 = vld [vmem:[#allocation2 + $0x1d0] sm:$0xff]
    %v121 = vld [vmem:[#allocation2 + $0x1d8] sm:$0xff]
    %v122 = vld [vmem:[#allocation2 + $0x1e0] sm:$0xff]
    %v123 = vld [vmem:[#allocation2 + $0x1e8] sm:$0xff]
    %v124 = vld [vmem:[#allocation2 + $0x1f0] sm:$0xff]
    %v125 = vld [vmem:[#allocation2 + $0x1f8] sm:$0xff]
    %v126 = vld [vmem:[#allocation5] sm:$0x3]
    %v127 = vld [vmem:[#allocation5 + $0x2] sm:$0x3]
    %v128 = vld [vmem:[#allocation5 + $0x4] sm:$0x3]
    %v129 = vld [vmem:[#allocation5 + $0x6] sm:$0x3]
    %v130 = vld [vmem:[#allocation7] sm:$0x3]
    %v131 = vld [vmem:[#allocation7 + $0x2] sm:$0x3]
    %v132 = vld [vmem:[#allocation7 + $0x4] sm:$0x3]
    %v133 = vld [vmem:[#allocation7 + $0x6] sm:$0x3]
    %v134 = vperm.slane %v130, 0
    %v135 = vperm.slane %v131, 0
    %v136 = vperm.slane %v132, 0
    %v137 = vperm.slane %v133, 0
    %v138 = vmul.f32 %v62, %v134
    %v139 = vmul.f32 %v63, %v134
    %v140 = vmul.f32 %v64, %v134
    %v141 = vmul.f32 %v65, %v134
    %v142 = vmul.f32 %v66, %v134
    %v143 = vmul.f32 %v67, %v134
    %v144 = vmul.f32 %v68, %v134
    %v145 = vmul.f32 %v69, %v134
    %v146 = vmul.f32 %v70, %v134
    %v147 = vmul.f32 %v71, %v134
    %v148 = vmul.f32 %v72, %v134
    %v149 = vmul.f32 %v73, %v134
    %v150 = vmul.f32 %v74, %v134
    %v151 = vmul.f32 %v75, %v134
    %v152 = vmul.f32 %v76, %v134
    %v153 = vmul.f32 %v77, %v134
    %v154 = vmul.f32 %v78, %v135
    %v155 = vmul.f32 %v79, %v135
    %v156 = vmul.f32 %v80, %v135
    %v157 = vmul.f32 %v81, %v135
    %v158 = vmul.f32 %v82, %v135
    %v159 = vmul.f32 %v83, %v135
    %v160 = vmul.f32 %v84, %v135
    %v161 = vmul.f32 %v85, %v135
    %v162 = vmul.f32 %v86, %v135
    %v163 = vmul.f32 %v87, %v135
    %v164 = vmul.f32 %v88, %v135
    %v165 = vmul.f32 %v89, %v135
    %v166 = vmul.f32 %v90, %v135
    %v167 = vmul.f32 %v91, %v135
    %v168 = vmul.f32 %v92, %v135
    %v169 = vmul.f32 %v93, %v135
    %v170 = vmul.f32 %v94, %v136
    %v171 = vmul.f32 %v95, %v136
    %v172 = vmul.f32 %v96, %v136
    %v173 = vmul.f32 %v97, %v136
    %v174 = vmul.f32 %v98, %v136
    %v175 = vmul.f32 %v99, %v136
    %v176 = vmul.f32 %v100, %v136
    %v177 = vmul.f32 %v101, %v136
    %v178 = vmul.f32 %v102, %v136
    %v179 = vmul.f32 %v103, %v136
    %v180 = vmul.f32 %v104, %v136
    %v181 = vmul.f32 %v105, %v136
    %v182 = vmul.f32 %v106, %v136
    %v183 = vmul.f32 %v107, %v136
    %v184 = vmul.f32 %v108, %v136
    %v185 = vmul.f32 %v109, %v136
    %v186 = vmul.f32 %v110, %v137
    %v187 = vmul.f32 %v111, %v137
    %v188 = vmul.f32 %v112, %v137
    %v189 = vmul.f32 %v113, %v137
    %v190 = vmul.f32 %v114, %v137
    %v191 = vmul.f32 %v115, %v137
    %v192 = vmul.f32 %v116, %v137
    %v193 = vmul.f32 %v117, %v137
    %v194 = vmul.f32 %v118, %v137
    %v195 = vmul.f32 %v119, %v137
    %v196 = vmul.f32 %v120, %v137
    %v197 = vmul.f32 %v121, %v137
    %v198 = vmul.f32 %v122, %v137
    %v199 = vmul.f32 %v123, %v137
    %v200 = vmul.f32 %v124, %v137
    %v201 = vmul.f32 %v125, %v137
    %202 = vadd.xlane.f32.xlu0 %v138
    %v203 = vpop.xlane.xlu0 %202
    %204 = vadd.xlane.f32.xlu0 %v139
    %v205 = vpop.xlane.xlu0 %204
    %206 = vadd.xlane.f32.xlu0 %v140
    %v207 = vpop.xlane.xlu0 %206
    %208 = vadd.xlane.f32.xlu0 %v141
    %v209 = vpop.xlane.xlu0 %208
    %210 = vadd.xlane.f32.xlu0 %v142
    %v211 = vpop.xlane.xlu0 %210
    %212 = vadd.xlane.f32.xlu0 %v143
    %v213 = vpop.xlane.xlu0 %212
    %214 = vadd.xlane.f32.xlu0 %v144
    %v215 = vpop.xlane.xlu0 %214
    %216 = vadd.xlane.f32.xlu0 %v145
    %v217 = vpop.xlane.xlu0 %216
    %218 = vadd.xlane.f32.xlu0 %v146
    %v219 = vpop.xlane.xlu0 %218
    %220 = vadd.xlane.f32.xlu0 %v147
    %v221 = vpop.xlane.xlu0 %220
    %222 = vadd.xlane.f32.xlu0 %v148
    %v223 = vpop.xlane.xlu0 %222
    %224 = vadd.xlane.f32.xlu0 %v149
    %v225 = vpop.xlane.xlu0 %224
    %226 = vadd.xlane.f32.xlu0 %v150
    %v227 = vpop.xlane.xlu0 %226
    %228 = vadd.xlane.f32.xlu0 %v151
    %v229 = vpop.xlane.xlu0 %228
    %230 = vadd.xlane.f32.xlu0 %v152
    %v231 = vpop.xlane.xlu0 %230
    %232 = vadd.xlane.f32.xlu0 %v153
    %v233 = vpop.xlane.xlu0 %232
    %234 = vadd.xlane.f32.xlu0 %v154
    %v235 = vpop.xlane.xlu0 %234
    %236 = vadd.xlane.f32.xlu0 %v155
    %v237 = vpop.xlane.xlu0 %236
    %238 = vadd.xlane.f32.xlu0 %v156
    %v239 = vpop.xlane.xlu0 %238
    %240 = vadd.xlane.f32.xlu0 %v157
    %v241 = vpop.xlane.xlu0 %240
    %242 = vadd.xlane.f32.xlu0 %v158
    %v243 = vpop.xlane.xlu0 %242
    %244 = vadd.xlane.f32.xlu0 %v159
    %v245 = vpop.xlane.xlu0 %244
    %246 = vadd.xlane.f32.xlu0 %v160
    %v247 = vpop.xlane.xlu0 %246
    %248 = vadd.xlane.f32.xlu0 %v161
    %v249 = vpop.xlane.xlu0 %248
    %250 = vadd.xlane.f32.xlu0 %v162
    %v251 = vpop.xlane.xlu0 %250
    %252 = vadd.xlane.f32.xlu0 %v163
    %v253 = vpop.xlane.xlu0 %252
    %254 = vadd.xlane.f32.xlu0 %v164
    %v255 = vpop.xlane.xlu0 %254
    %256 = vadd.xlane.f32.xlu0 %v165
    %v257 = vpop.xlane.xlu0 %256
    %258 = vadd.xlane.f32.xlu0 %v166
    %v259 = vpop.xlane.xlu0 %258
    %260 = vadd.xlane.f32.xlu0 %v167
    %v261 = vpop.xlane.xlu0 %260
    %262 = vadd.xlane.f32.xlu0 %v168
    %v263 = vpop.xlane.xlu0 %262
    %264 = vadd.xlane.f32.xlu0 %v169
    %v265 = vpop.xlane.xlu0 %264
    %266 = vadd.xlane.f32.xlu0 %v170
    %v267 = vpop.xlane.xlu0 %266
    %268 = vadd.xlane.f32.xlu0 %v171
    %v269 = vpop.xlane.xlu0 %268
    %270 = vadd.xlane.f32.xlu0 %v172
    %v271 = vpop.xlane.xlu0 %270
    %272 = vadd.xlane.f32.xlu0 %v173
    %v273 = vpop.xlane.xlu0 %272
    %274 = vadd.xlane.f32.xlu0 %v174
    %v275 = vpop.xlane.xlu0 %274
    %276 = vadd.xlane.f32.xlu0 %v175
    %v277 = vpop.xlane.xlu0 %276
    %278 = vadd.xlane.f32.xlu0 %v176
    %v279 = vpop.xlane.xlu0 %278
    %280 = vadd.xlane.f32.xlu0 %v177
    %v281 = vpop.xlane.xlu0 %280
    %282 = vadd.xlane.f32.xlu0 %v178
    %v283 = vpop.xlane.xlu0 %282
    %284 = vadd.xlane.f32.xlu0 %v179
    %v285 = vpop.xlane.xlu0 %284
    %286 = vadd.xlane.f32.xlu0 %v180
    %v287 = vpop.xlane.xlu0 %286
    %288 = vadd.xlane.f32.xlu0 %v181
    %v289 = vpop.xlane.xlu0 %288
    %290 = vadd.xlane.f32.xlu0 %v182
    %v291 = vpop.xlane.xlu0 %290
    %292 = vadd.xlane.f32.xlu0 %v183
    %v293 = vpop.xlane.xlu0 %292
    %294 = vadd.xlane.f32.xlu0 %v184
    %v295 = vpop.xlane.xlu0 %294
    %296 = vadd.xlane.f32.xlu0 %v185
    %v297 = vpop.xlane.xlu0 %296
    %298 = vadd.xlane.f32.xlu0 %v186
    %v299 = vpop.xlane.xlu0 %298
    %300 = vadd.xlane.f32.xlu0 %v187
    %v301 = vpop.xlane.xlu0 %300
    %302 = vadd.xlane.f32.xlu0 %v188
    %v303 = vpop.xlane.xlu0 %302
    %304 = vadd.xlane.f32.xlu0 %v189
    %v305 = vpop.xlane.xlu0 %304
    %306 = vadd.xlane.f32.xlu0 %v190
    %v307 = vpop.xlane.xlu0 %306
    %308 = vadd.xlane.f32.xlu0 %v191
    %v309 = vpop.xlane.xlu0 %308
    %310 = vadd.xlane.f32.xlu0 %v192
    %v311 = vpop.xlane.xlu0 %310
    %312 = vadd.xlane.f32.xlu0 %v193
    %v313 = vpop.xlane.xlu0 %312
    %314 = vadd.xlane.f32.xlu0 %v194
    %v315 = vpop.xlane.xlu0 %314
    %316 = vadd.xlane.f32.xlu0 %v195
    %v317 = vpop.xlane.xlu0 %316
    %318 = vadd.xlane.f32.xlu0 %v196
    %v319 = vpop.xlane.xlu0 %318
    %320 = vadd.xlane.f32.xlu0 %v197
    %v321 = vpop.xlane.xlu0 %320
    %322 = vadd.xlane.f32.xlu0 %v198
    %v323 = vpop.xlane.xlu0 %322
    %324 = vadd.xlane.f32.xlu0 %v199
    %v325 = vpop.xlane.xlu0 %324
    %326 = vadd.xlane.f32.xlu0 %v200
    %v327 = vpop.xlane.xlu0 %326
    %328 = vadd.xlane.f32.xlu0 %v201
    %v329 = vpop.xlane.xlu0 %328
    %v334 = vperm.slane %v126, 0
    %v335 = vlaneseq
    %v336 = vshrl.u32 %v335, 7
    %338 = vset.pattern.permute.xlu0 %v336
    %339 = vperm.xlu0 %338, %v334
    %v340 = vpop.permute.xlu0 %339
    %v341 = vlaneseq
    %v342 = vshrl.u32 %v341, 7
    %v343 = vadd.s32 %v342, 8
    %344 = vset.pattern.permute.xlu0 %v343
    %345 = vperm.xlu0 %344, %v334
    %v346 = vpop.permute.xlu0 %345
    %v347 = vlaneseq
    %v348 = vshrl.u32 %v347, 7
    %v349 = vadd.s32 %v348, 16
    %350 = vset.pattern.permute.xlu0 %v349
    %351 = vperm.xlu0 %350, %v334
    %v352 = vpop.permute.xlu0 %351
    %v353 = vlaneseq
    %v354 = vshrl.u32 %v353, 7
    %v355 = vadd.s32 %v354, 24
    %356 = vset.pattern.permute.xlu0 %v355
    %357 = vperm.xlu0 %356, %v334
    %v358 = vpop.permute.xlu0 %357
    %v359 = vlaneseq
    %v360 = vshrl.u32 %v359, 7
    %v361 = vadd.s32 %v360, 32
    %362 = vset.pattern.permute.xlu0 %v361
    %363 = vperm.xlu0 %362, %v334
    %v364 = vpop.permute.xlu0 %363
    %v365 = vlaneseq
    %v366 = vshrl.u32 %v365, 7
    %v367 = vadd.s32 %v366, 40
    %368 = vset.pattern.permute.xlu0 %v367
    %369 = vperm.xlu0 %368, %v334
    %v370 = vpop.permute.xlu0 %369
    %v371 = vlaneseq
    %v372 = vshrl.u32 %v371, 7
    %v373 = vadd.s32 %v372, 48
    %374 = vset.pattern.permute.xlu0 %v373
    %375 = vperm.xlu0 %374, %v334
    %v376 = vpop.permute.xlu0 %375
    %v377 = vlaneseq
    %v378 = vshrl.u32 %v377, 7
    %v379 = vadd.s32 %v378, 56
    %380 = vset.pattern.permute.xlu0 %v379
    %381 = vperm.xlu0 %380, %v334
    %v382 = vpop.permute.xlu0 %381
    %v383 = vlaneseq
    %v384 = vshrl.u32 %v383, 7
    %v385 = vadd.s32 %v384, 64
    %386 = vset.pattern.permute.xlu0 %v385
    %387 = vperm.xlu0 %386, %v334
    %v388 = vpop.permute.xlu0 %387
    %v389 = vlaneseq
    %v390 = vshrl.u32 %v389, 7
    %v391 = vadd.s32 %v390, 72
    %392 = vset.pattern.permute.xlu0 %v391
    %393 = vperm.xlu0 %392, %v334
    %v394 = vpop.permute.xlu0 %393
    %v395 = vlaneseq
    %v396 = vshrl.u32 %v395, 7
    %v397 = vadd.s32 %v396, 80
    %398 = vset.pattern.permute.xlu0 %v397
    %399 = vperm.xlu0 %398, %v334
    %v400 = vpop.permute.xlu0 %399
    %v401 = vlaneseq
    %v402 = vshrl.u32 %v401, 7
    %v403 = vadd.s32 %v402, 88
    %404 = vset.pattern.permute.xlu0 %v403
    %405 = vperm.xlu0 %404, %v334
    %v406 = vpop.permute.xlu0 %405
    %v407 = vlaneseq
    %v408 = vshrl.u32 %v407, 7
    %v409 = vadd.s32 %v408, 96
    %410 = vset.pattern.permute.xlu0 %v409
    %411 = vperm.xlu0 %410, %v334
    %v412 = vpop.permute.xlu0 %411
    %v413 = vlaneseq
    %v414 = vshrl.u32 %v413, 7
    %v415 = vadd.s32 %v414, 104
    %416 = vset.pattern.permute.xlu0 %v415
    %417 = vperm.xlu0 %416, %v334
    %v418 = vpop.permute.xlu0 %417
    %v419 = vlaneseq
    %v420 = vshrl.u32 %v419, 7
    %v421 = vadd.s32 %v420, 112
    %422 = vset.pattern.permute.xlu0 %v421
    %423 = vperm.xlu0 %422, %v334
    %v424 = vpop.permute.xlu0 %423
    %v425 = vlaneseq
    %v426 = vshrl.u32 %v425, 7
    %v427 = vadd.s32 %v426, 120
    %428 = vset.pattern.permute.xlu0 %v427
    %429 = vperm.xlu0 %428, %v334
    %v430 = vpop.permute.xlu0 %429
    %v431 = vperm.slane %v127, 0
    %v432 = vlaneseq
    %v433 = vshrl.u32 %v432, 7
    %435 = vset.pattern.permute.xlu0 %v433
    %436 = vperm.xlu0 %435, %v431
    %v437 = vpop.permute.xlu0 %436
    %v438 = vlaneseq
    %v439 = vshrl.u32 %v438, 7
    %v440 = vadd.s32 %v439, 8
    %441 = vset.pattern.permute.xlu0 %v440
    %442 = vperm.xlu0 %441, %v431
    %v443 = vpop.permute.xlu0 %442
    %v444 = vlaneseq
    %v445 = vshrl.u32 %v444, 7
    %v446 = vadd.s32 %v445, 16
    %447 = vset.pattern.permute.xlu0 %v446
    %448 = vperm.xlu0 %447, %v431
    %v449 = vpop.permute.xlu0 %448
    %v450 = vlaneseq
    %v451 = vshrl.u32 %v450, 7
    %v452 = vadd.s32 %v451, 24
    %453 = vset.pattern.permute.xlu0 %v452
    %454 = vperm.xlu0 %453, %v431
    %v455 = vpop.permute.xlu0 %454
    %v456 = vlaneseq
    %v457 = vshrl.u32 %v456, 7
    %v458 = vadd.s32 %v457, 32
    %459 = vset.pattern.permute.xlu0 %v458
    %460 = vperm.xlu0 %459, %v431
    %v461 = vpop.permute.xlu0 %460
    %v462 = vlaneseq
    %v463 = vshrl.u32 %v462, 7
    %v464 = vadd.s32 %v463, 40
    %465 = vset.pattern.permute.xlu0 %v464
    %466 = vperm.xlu0 %465, %v431
    %v467 = vpop.permute.xlu0 %466
    %v468 = vlaneseq
    %v469 = vshrl.u32 %v468, 7
    %v470 = vadd.s32 %v469, 48
    %471 = vset.pattern.permute.xlu0 %v470
    %472 = vperm.xlu0 %471, %v431
    %v473 = vpop.permute.xlu0 %472
    %v474 = vlaneseq
    %v475 = vshrl.u32 %v474, 7
    %v476 = vadd.s32 %v475, 56
    %477 = vset.pattern.permute.xlu0 %v476
    %478 = vperm.xlu0 %477, %v431
    %v479 = vpop.permute.xlu0 %478
    %v480 = vlaneseq
    %v481 = vshrl.u32 %v480, 7
    %v482 = vadd.s32 %v481, 64
    %483 = vset.pattern.permute.xlu0 %v482
    %484 = vperm.xlu0 %483, %v431
    %v485 = vpop.permute.xlu0 %484
    %v486 = vlaneseq
    %v487 = vshrl.u32 %v486, 7
    %v488 = vadd.s32 %v487, 72
    %489 = vset.pattern.permute.xlu0 %v488
    %490 = vperm.xlu0 %489, %v431
    %v491 = vpop.permute.xlu0 %490
    %v492 = vlaneseq
    %v493 = vshrl.u32 %v492, 7
    %v494 = vadd.s32 %v493, 80
    %495 = vset.pattern.permute.xlu0 %v494
    %496 = vperm.xlu0 %495, %v431
    %v497 = vpop.permute.xlu0 %496
    %v498 = vlaneseq
    %v499 = vshrl.u32 %v498, 7
    %v500 = vadd.s32 %v499, 88
    %501 = vset.pattern.permute.xlu0 %v500
    %502 = vperm.xlu0 %501, %v431
    %v503 = vpop.permute.xlu0 %502
    %v504 = vlaneseq
    %v505 = vshrl.u32 %v504, 7
    %v506 = vadd.s32 %v505, 96
    %507 = vset.pattern.permute.xlu0 %v506
    %508 = vperm.xlu0 %507, %v431
    %v509 = vpop.permute.xlu0 %508
    %v510 = vlaneseq
    %v511 = vshrl.u32 %v510, 7
    %v512 = vadd.s32 %v511, 104
    %513 = vset.pattern.permute.xlu0 %v512
    %514 = vperm.xlu0 %513, %v431
    %v515 = vpop.permute.xlu0 %514
    %v516 = vlaneseq
    %v517 = vshrl.u32 %v516, 7
    %v518 = vadd.s32 %v517, 112
    %519 = vset.pattern.permute.xlu0 %v518
    %520 = vperm.xlu0 %519, %v431
    %v521 = vpop.permute.xlu0 %520
    %v522 = vlaneseq
    %v523 = vshrl.u32 %v522, 7
    %v524 = vadd.s32 %v523, 120
    %525 = vset.pattern.permute.xlu0 %v524
    %526 = vperm.xlu0 %525, %v431
    %v527 = vpop.permute.xlu0 %526
    %v528 = vperm.slane %v128, 0
    %v529 = vlaneseq
    %v530 = vshrl.u32 %v529, 7
    %532 = vset.pattern.permute.xlu0 %v530
    %533 = vperm.xlu0 %532, %v528
    %v534 = vpop.permute.xlu0 %533
    %v535 = vlaneseq
    %v536 = vshrl.u32 %v535, 7
    %v537 = vadd.s32 %v536, 8
    %538 = vset.pattern.permute.xlu0 %v537
    %539 = vperm.xlu0 %538, %v528
    %v540 = vpop.permute.xlu0 %539
    %v541 = vlaneseq
    %v542 = vshrl.u32 %v541, 7
    %v543 = vadd.s32 %v542, 16
    %544 = vset.pattern.permute.xlu0 %v543
    %545 = vperm.xlu0 %544, %v528
    %v546 = vpop.permute.xlu0 %545
    %v547 = vlaneseq
    %v548 = vshrl.u32 %v547, 7
    %v549 = vadd.s32 %v548, 24
    %550 = vset.pattern.permute.xlu0 %v549
    %551 = vperm.xlu0 %550, %v528
    %v552 = vpop.permute.xlu0 %551
    %v553 = vlaneseq
    %v554 = vshrl.u32 %v553, 7
    %v555 = vadd.s32 %v554, 32
    %556 = vset.pattern.permute.xlu0 %v555
    %557 = vperm.xlu0 %556, %v528
    %v558 = vpop.permute.xlu0 %557
    %v559 = vlaneseq
    %v560 = vshrl.u32 %v559, 7
    %v561 = vadd.s32 %v560, 40
    %562 = vset.pattern.permute.xlu0 %v561
    %563 = vperm.xlu0 %562, %v528
    %v564 = vpop.permute.xlu0 %563
    %v565 = vlaneseq
    %v566 = vshrl.u32 %v565, 7
    %v567 = vadd.s32 %v566, 48
    %568 = vset.pattern.permute.xlu0 %v567
    %569 = vperm.xlu0 %568, %v528
    %v570 = vpop.permute.xlu0 %569
    %v571 = vlaneseq
    %v572 = vshrl.u32 %v571, 7
    %v573 = vadd.s32 %v572, 56
    %574 = vset.pattern.permute.xlu0 %v573
    %575 = vperm.xlu0 %574, %v528
    %v576 = vpop.permute.xlu0 %575
    %v577 = vlaneseq
    %v578 = vshrl.u32 %v577, 7
    %v579 = vadd.s32 %v578, 64
    %580 = vset.pattern.permute.xlu0 %v579
    %581 = vperm.xlu0 %580, %v528
    %v582 = vpop.permute.xlu0 %581
    %v583 = vlaneseq
    %v584 = vshrl.u32 %v583, 7
    %v585 = vadd.s32 %v584, 72
    %586 = vset.pattern.permute.xlu0 %v585
    %587 = vperm.xlu0 %586, %v528
    %v588 = vpop.permute.xlu0 %587
    %v589 = vlaneseq
    %v590 = vshrl.u32 %v589, 7
    %v591 = vadd.s32 %v590, 80
    %592 = vset.pattern.permute.xlu0 %v591
    %593 = vperm.xlu0 %592, %v528
    %v594 = vpop.permute.xlu0 %593
    %v595 = vlaneseq
    %v596 = vshrl.u32 %v595, 7
    %v597 = vadd.s32 %v596, 88
    %598 = vset.pattern.permute.xlu0 %v597
    %599 = vperm.xlu0 %598, %v528
    %v600 = vpop.permute.xlu0 %599
    %v601 = vlaneseq
    %v602 = vshrl.u32 %v601, 7
    %v603 = vadd.s32 %v602, 96
    %604 = vset.pattern.permute.xlu0 %v603
    %605 = vperm.xlu0 %604, %v528
    %v606 = vpop.permute.xlu0 %605
    %v607 = vlaneseq
    %v608 = vshrl.u32 %v607, 7
    %v609 = vadd.s32 %v608, 104
    %610 = vset.pattern.permute.xlu0 %v609
    %611 = vperm.xlu0 %610, %v528
    %v612 = vpop.permute.xlu0 %611
    %v613 = vlaneseq
    %v614 = vshrl.u32 %v613, 7
    %v615 = vadd.s32 %v614, 112
    %616 = vset.pattern.permute.xlu0 %v615
    %617 = vperm.xlu0 %616, %v528
    %v618 = vpop.permute.xlu0 %617
    %v619 = vlaneseq
    %v620 = vshrl.u32 %v619, 7
    %v621 = vadd.s32 %v620, 120
    %622 = vset.pattern.permute.xlu0 %v621
    %623 = vperm.xlu0 %622, %v528
    %v624 = vpop.permute.xlu0 %623
    %v625 = vperm.slane %v129, 0
    %v626 = vlaneseq
    %v627 = vshrl.u32 %v626, 7
    %629 = vset.pattern.permute.xlu0 %v627
    %630 = vperm.xlu0 %629, %v625
    %v631 = vpop.permute.xlu0 %630
    %v632 = vlaneseq
    %v633 = vshrl.u32 %v632, 7
    %v634 = vadd.s32 %v633, 8
    %635 = vset.pattern.permute.xlu0 %v634
    %636 = vperm.xlu0 %635, %v625
    %v637 = vpop.permute.xlu0 %636
    %v638 = vlaneseq
    %v639 = vshrl.u32 %v638, 7
    %v640 = vadd.s32 %v639, 16
    %641 = vset.pattern.permute.xlu0 %v640
    %642 = vperm.xlu0 %641, %v625
    %v643 = vpop.permute.xlu0 %642
    %v644 = vlaneseq
    %v645 = vshrl.u32 %v644, 7
    %v646 = vadd.s32 %v645, 24
    %647 = vset.pattern.permute.xlu0 %v646
    %648 = vperm.xlu0 %647, %v625
    %v649 = vpop.permute.xlu0 %648
    %v650 = vlaneseq
    %v651 = vshrl.u32 %v650, 7
    %v652 = vadd.s32 %v651, 32
    %653 = vset.pattern.permute.xlu0 %v652
    %654 = vperm.xlu0 %653, %v625
    %v655 = vpop.permute.xlu0 %654
    %v656 = vlaneseq
    %v657 = vshrl.u32 %v656, 7
    %v658 = vadd.s32 %v657, 40
    %659 = vset.pattern.permute.xlu0 %v658
    %660 = vperm.xlu0 %659, %v625
    %v661 = vpop.permute.xlu0 %660
    %v662 = vlaneseq
    %v663 = vshrl.u32 %v662, 7
    %v664 = vadd.s32 %v663, 48
    %665 = vset.pattern.permute.xlu0 %v664
    %666 = vperm.xlu0 %665, %v625
    %v667 = vpop.permute.xlu0 %666
    %v668 = vlaneseq
    %v669 = vshrl.u32 %v668, 7
    %v670 = vadd.s32 %v669, 56
    %671 = vset.pattern.permute.xlu0 %v670
    %672 = vperm.xlu0 %671, %v625
    %v673 = vpop.permute.xlu0 %672
    %v674 = vlaneseq
    %v675 = vshrl.u32 %v674, 7
    %v676 = vadd.s32 %v675, 64
    %677 = vset.pattern.permute.xlu0 %v676
    %678 = vperm.xlu0 %677, %v625
    %v679 = vpop.permute.xlu0 %678
    %v680 = vlaneseq
    %v681 = vshrl.u32 %v680, 7
    %v682 = vadd.s32 %v681, 72
    %683 = vset.pattern.permute.xlu0 %v682
    %684 = vperm.xlu0 %683, %v625
    %v685 = vpop.permute.xlu0 %684
    %v686 = vlaneseq
    %v687 = vshrl.u32 %v686, 7
    %v688 = vadd.s32 %v687, 80
    %689 = vset.pattern.permute.xlu0 %v688
    %690 = vperm.xlu0 %689, %v625
    %v691 = vpop.permute.xlu0 %690
    %v692 = vlaneseq
    %v693 = vshrl.u32 %v692, 7
    %v694 = vadd.s32 %v693, 88
    %695 = vset.pattern.permute.xlu0 %v694
    %696 = vperm.xlu0 %695, %v625
    %v697 = vpop.permute.xlu0 %696
    %v698 = vlaneseq
    %v699 = vshrl.u32 %v698, 7
    %v700 = vadd.s32 %v699, 96
    %701 = vset.pattern.permute.xlu0 %v700
    %702 = vperm.xlu0 %701, %v625
    %v703 = vpop.permute.xlu0 %702
    %v704 = vlaneseq
    %v705 = vshrl.u32 %v704, 7
    %v706 = vadd.s32 %v705, 104
    %707 = vset.pattern.permute.xlu0 %v706
    %708 = vperm.xlu0 %707, %v625
    %v709 = vpop.permute.xlu0 %708
    %v710 = vlaneseq
    %v711 = vshrl.u32 %v710, 7
    %v712 = vadd.s32 %v711, 112
    %713 = vset.pattern.permute.xlu0 %v712
    %714 = vperm.xlu0 %713, %v625
    %v715 = vpop.permute.xlu0 %714
    %v716 = vlaneseq
    %v717 = vshrl.u32 %v716, 7
    %v718 = vadd.s32 %v717, 120
    %719 = vset.pattern.permute.xlu0 %v718
    %720 = vperm.xlu0 %719, %v625
    %v721 = vpop.permute.xlu0 %720
    %v786 = vsub.f32 %v203, %v340
    %v787 = vsub.f32 %v205, %v346
    %v788 = vsub.f32 %v207, %v352
    %v789 = vsub.f32 %v209, %v358
    %v790 = vsub.f32 %v211, %v364
    %v791 = vsub.f32 %v213, %v370
    %v792 = vsub.f32 %v215, %v376
    %v793 = vsub.f32 %v217, %v382
    %v794 = vsub.f32 %v219, %v388
    %v795 = vsub.f32 %v221, %v394
    %v796 = vsub.f32 %v223, %v400
    %v797 = vsub.f32 %v225, %v406
    %v798 = vsub.f32 %v227, %v412
    %v799 = vsub.f32 %v229, %v418
    %v800 = vsub.f32 %v231, %v424
    %v801 = vsub.f32 %v233, %v430
    %v802 = vsub.f32 %v235, %v437
    %v803 = vsub.f32 %v237, %v443
    %v804 = vsub.f32 %v239, %v449
    %v805 = vsub.f32 %v241, %v455
    %v806 = vsub.f32 %v243, %v461
    %v807 = vsub.f32 %v245, %v467
    %v808 = vsub.f32 %v247, %v473
    %v809 = vsub.f32 %v249, %v479
    %v810 = vsub.f32 %v251, %v485
    %v811 = vsub.f32 %v253, %v491
    %v812 = vsub.f32 %v255, %v497
    %v813 = vsub.f32 %v257, %v503
    %v814 = vsub.f32 %v259, %v509
    %v815 = vsub.f32 %v261, %v515
    %v816 = vsub.f32 %v263, %v521
    %v817 = vsub.f32 %v265, %v527
    %v818 = vsub.f32 %v267, %v534
    %v819 = vsub.f32 %v269, %v540
    %v820 = vsub.f32 %v271, %v546
    %v821 = vsub.f32 %v273, %v552
    %v822 = vsub.f32 %v275, %v558
    %v823 = vsub.f32 %v277, %v564
    %v824 = vsub.f32 %v279, %v570
    %v825 = vsub.f32 %v281, %v576
    %v826 = vsub.f32 %v283, %v582
    %v827 = vsub.f32 %v285, %v588
    %v828 = vsub.f32 %v287, %v594
    %v829 = vsub.f32 %v289, %v600
    %v830 = vsub.f32 %v291, %v606
    %v831 = vsub.f32 %v293, %v612
    %v832 = vsub.f32 %v295, %v618
    %v833 = vsub.f32 %v297, %v624
    %v834 = vsub.f32 %v299, %v631
    %v835 = vsub.f32 %v301, %v637
    %v836 = vsub.f32 %v303, %v643
    %v837 = vsub.f32 %v305, %v649
    %v838 = vsub.f32 %v307, %v655
    %v839 = vsub.f32 %v309, %v661
    %v840 = vsub.f32 %v311, %v667
    %v841 = vsub.f32 %v313, %v673
    %v842 = vsub.f32 %v315, %v679
    %v843 = vsub.f32 %v317, %v685
    %v844 = vsub.f32 %v319, %v691
    %v845 = vsub.f32 %v321, %v697
    %v846 = vsub.f32 %v323, %v703
    %v847 = vsub.f32 %v325, %v709
    %v848 = vsub.f32 %v327, %v715
    %v849 = vsub.f32 %v329, %v721
    %914 = vset.pattern.permute.xlu0 0
    %915 = vperm.xlu0 %914, %v786
    %v916 = vpop.permute.xlu0 %915
    %917 = vset.pattern.permute.xlu0 0
    %918 = vperm.xlu0 %917, %v787
    %v919 = vpop.permute.xlu0 %918
    %920 = vset.pattern.permute.xlu0 0
    %921 = vperm.xlu0 %920, %v788
    %v922 = vpop.permute.xlu0 %921
    %923 = vset.pattern.permute.xlu0 0
    %924 = vperm.xlu0 %923, %v789
    %v925 = vpop.permute.xlu0 %924
    %926 = vset.pattern.permute.xlu0 0
    %927 = vperm.xlu0 %926, %v790
    %v928 = vpop.permute.xlu0 %927
    %929 = vset.pattern.permute.xlu0 0
    %930 = vperm.xlu0 %929, %v791
    %v931 = vpop.permute.xlu0 %930
    %932 = vset.pattern.permute.xlu0 0
    %933 = vperm.xlu0 %932, %v792
    %v934 = vpop.permute.xlu0 %933
    %935 = vset.pattern.permute.xlu0 0
    %936 = vperm.xlu0 %935, %v793
    %v937 = vpop.permute.xlu0 %936
    %938 = vset.pattern.permute.xlu0 0
    %939 = vperm.xlu0 %938, %v794
    %v940 = vpop.permute.xlu0 %939
    %941 = vset.pattern.permute.xlu0 0
    %942 = vperm.xlu0 %941, %v795
    %v943 = vpop.permute.xlu0 %942
    %944 = vset.pattern.permute.xlu0 0
    %945 = vperm.xlu0 %944, %v796
    %v946 = vpop.permute.xlu0 %945
    %947 = vset.pattern.permute.xlu0 0
    %948 = vperm.xlu0 %947, %v797
    %v949 = vpop.permute.xlu0 %948
    %950 = vset.pattern.permute.xlu0 0
    %951 = vperm.xlu0 %950, %v798
    %v952 = vpop.permute.xlu0 %951
    %953 = vset.pattern.permute.xlu0 0
    %954 = vperm.xlu0 %953, %v799
    %v955 = vpop.permute.xlu0 %954
    %956 = vset.pattern.permute.xlu0 0
    %957 = vperm.xlu0 %956, %v800
    %v958 = vpop.permute.xlu0 %957
    %959 = vset.pattern.permute.xlu0 0
    %960 = vperm.xlu0 %959, %v801
    %v961 = vpop.permute.xlu0 %960
    %962 = vset.pattern.permute.xlu0 0
    %963 = vperm.xlu0 %962, %v802
    %v964 = vpop.permute.xlu0 %963
    %965 = vset.pattern.permute.xlu0 0
    %966 = vperm.xlu0 %965, %v803
    %v967 = vpop.permute.xlu0 %966
    %968 = vset.pattern.permute.xlu0 0
    %969 = vperm.xlu0 %968, %v804
    %v970 = vpop.permute.xlu0 %969
    %971 = vset.pattern.permute.xlu0 0
    %972 = vperm.xlu0 %971, %v805
    %v973 = vpop.permute.xlu0 %972
    %974 = vset.pattern.permute.xlu0 0
    %975 = vperm.xlu0 %974, %v806
    %v976 = vpop.permute.xlu0 %975
    %977 = vset.pattern.permute.xlu0 0
    %978 = vperm.xlu0 %977, %v807
    %v979 = vpop.permute.xlu0 %978
    %980 = vset.pattern.permute.xlu0 0
    %981 = vperm.xlu0 %980, %v808
    %v982 = vpop.permute.xlu0 %981
    %983 = vset.pattern.permute.xlu0 0
    %984 = vperm.xlu0 %983, %v809
    %v985 = vpop.permute.xlu0 %984
    %986 = vset.pattern.permute.xlu0 0
    %987 = vperm.xlu0 %986, %v810
    %v988 = vpop.permute.xlu0 %987
    %989 = vset.pattern.permute.xlu0 0
    %990 = vperm.xlu0 %989, %v811
    %v991 = vpop.permute.xlu0 %990
    %992 = vset.pattern.permute.xlu0 0
    %993 = vperm.xlu0 %992, %v812
    %v994 = vpop.permute.xlu0 %993
    %995 = vset.pattern.permute.xlu0 0
    %996 = vperm.xlu0 %995, %v813
    %v997 = vpop.permute.xlu0 %996
    %998 = vset.pattern.permute.xlu0 0
    %999 = vperm.xlu0 %998, %v814
    %v1000 = vpop.permute.xlu0 %999
    %1001 = vset.pattern.permute.xlu0 0
    %1002 = vperm.xlu0 %1001, %v815
    %v1003 = vpop.permute.xlu0 %1002
    %1004 = vset.pattern.permute.xlu0 0
    %1005 = vperm.xlu0 %1004, %v816
    %v1006 = vpop.permute.xlu0 %1005
    %1007 = vset.pattern.permute.xlu0 0
    %1008 = vperm.xlu0 %1007, %v817
    %v1009 = vpop.permute.xlu0 %1008
    %1010 = vset.pattern.permute.xlu0 0
    %1011 = vperm.xlu0 %1010, %v818
    %v1012 = vpop.permute.xlu0 %1011
    %1013 = vset.pattern.permute.xlu0 0
    %1014 = vperm.xlu0 %1013, %v819
    %v1015 = vpop.permute.xlu0 %1014
    %1016 = vset.pattern.permute.xlu0 0
    %1017 = vperm.xlu0 %1016, %v820
    %v1018 = vpop.permute.xlu0 %1017
    %1019 = vset.pattern.permute.xlu0 0
    %1020 = vperm.xlu0 %1019, %v821
    %v1021 = vpop.permute.xlu0 %1020
    %1022 = vset.pattern.permute.xlu0 0
    %1023 = vperm.xlu0 %1022, %v822
    %v1024 = vpop.permute.xlu0 %1023
    %1025 = vset.pattern.permute.xlu0 0
    %1026 = vperm.xlu0 %1025, %v823
    %v1027 = vpop.permute.xlu0 %1026
    %1028 = vset.pattern.permute.xlu0 0
    %1029 = vperm.xlu0 %1028, %v824
    %v1030 = vpop.permute.xlu0 %1029
    %1031 = vset.pattern.permute.xlu0 0
    %1032 = vperm.xlu0 %1031, %v825
    %v1033 = vpop.permute.xlu0 %1032
    %1034 = vset.pattern.permute.xlu0 0
    %1035 = vperm.xlu0 %1034, %v826
    %v1036 = vpop.permute.xlu0 %1035
    %1037 = vset.pattern.permute.xlu0 0
    %1038 = vperm.xlu0 %1037, %v827
    %v1039 = vpop.permute.xlu0 %1038
    %1040 = vset.pattern.permute.xlu0 0
    %1041 = vperm.xlu0 %1040, %v828
    %v1042 = vpop.permute.xlu0 %1041
    %1043 = vset.pattern.permute.xlu0 0
    %1044 = vperm.xlu0 %1043, %v829
    %v1045 = vpop.permute.xlu0 %1044
    %1046 = vset.pattern.permute.xlu0 0
    %1047 = vperm.xlu0 %1046, %v830
    %v1048 = vpop.permute.xlu0 %1047
    %1049 = vset.pattern.permute.xlu0 0
    %1050 = vperm.xlu0 %1049, %v831
    %v1051 = vpop.permute.xlu0 %1050
    %1052 = vset.pattern.permute.xlu0 0
    %1053 = vperm.xlu0 %1052, %v832
    %v1054 = vpop.permute.xlu0 %1053
    %1055 = vset.pattern.permute.xlu0 0
    %1056 = vperm.xlu0 %1055, %v833
    %v1057 = vpop.permute.xlu0 %1056
    %1058 = vset.pattern.permute.xlu0 0
    %1059 = vperm.xlu0 %1058, %v834
    %v1060 = vpop.permute.xlu0 %1059
    %1061 = vset.pattern.permute.xlu0 0
    %1062 = vperm.xlu0 %1061, %v835
    %v1063 = vpop.permute.xlu0 %1062
    %1064 = vset.pattern.permute.xlu0 0
    %1065 = vperm.xlu0 %1064, %v836
    %v1066 = vpop.permute.xlu0 %1065
    %1067 = vset.pattern.permute.xlu0 0
    %1068 = vperm.xlu0 %1067, %v837
    %v1069 = vpop.permute.xlu0 %1068
    %1070 = vset.pattern.permute.xlu0 0
    %1071 = vperm.xlu0 %1070, %v838
    %v1072 = vpop.permute.xlu0 %1071
    %1073 = vset.pattern.permute.xlu0 0
    %1074 = vperm.xlu0 %1073, %v839
    %v1075 = vpop.permute.xlu0 %1074
    %1076 = vset.pattern.permute.xlu0 0
    %1077 = vperm.xlu0 %1076, %v840
    %v1078 = vpop.permute.xlu0 %1077
    %1079 = vset.pattern.permute.xlu0 0
    %1080 = vperm.xlu0 %1079, %v841
    %v1081 = vpop.permute.xlu0 %1080
    %1082 = vset.pattern.permute.xlu0 0
    %1083 = vperm.xlu0 %1082, %v842
    %v1084 = vpop.permute.xlu0 %1083
    %1085 = vset.pattern.permute.xlu0 0
    %1086 = vperm.xlu0 %1085, %v843
    %v1087 = vpop.permute.xlu0 %1086
    %1088 = vset.pattern.permute.xlu0 0
    %1089 = vperm.xlu0 %1088, %v844
    %v1090 = vpop.permute.xlu0 %1089
    %1091 = vset.pattern.permute.xlu0 0
    %1092 = vperm.xlu0 %1091, %v845
    %v1093 = vpop.permute.xlu0 %1092
    %1094 = vset.pattern.permute.xlu0 0
    %1095 = vperm.xlu0 %1094, %v846
    %v1096 = vpop.permute.xlu0 %1095
    %1097 = vset.pattern.permute.xlu0 0
    %1098 = vperm.xlu0 %1097, %v847
    %v1099 = vpop.permute.xlu0 %1098
    %1100 = vset.pattern.permute.xlu0 0
    %1101 = vperm.xlu0 %1100, %v848
    %v1102 = vpop.permute.xlu0 %1101
    %1103 = vset.pattern.permute.xlu0 0
    %1104 = vperm.xlu0 %1103, %v849
    %v1105 = vpop.permute.xlu0 %1104
    %v1106 = vlaneseq
    %v1107 = vand.u32 %v1106, 127
    %v1108 = vperm.slane %v916, %v1107
    %v1109 = vadd.s32 %v1107, 4294967288
    %v1110 = vperm.slane %v919, %v1109
    %vm1111 = vcmask 130112
    %v1112 = vsel %vm1111, %v1110, %v1108
    %v1113 = vadd.s32 %v1107, 4294967280
    %v1114 = vperm.slane %v922, %v1113
    %vm1115 = vcmask 195712
    %v1116 = vsel %vm1115, %v1114, %v1112
    %v1117 = vadd.s32 %v1107, 4294967272
    %v1118 = vperm.slane %v925, %v1117
    %vm1119 = vcmask 261312
    %v1120 = vsel %vm1119, %v1118, %v1116
    %v1121 = vadd.s32 %v1107, 4294967264
    %v1122 = vperm.slane %v928, %v1121
    %vm1123 = vcmask 326912
    %v1124 = vsel %vm1123, %v1122, %v1120
    %v1125 = vadd.s32 %v1107, 4294967256
    %v1126 = vperm.slane %v931, %v1125
    %vm1127 = vcmask 392512
    %v1128 = vsel %vm1127, %v1126, %v1124
    %v1129 = vadd.s32 %v1107, 4294967248
    %v1130 = vperm.slane %v934, %v1129
    %vm1131 = vcmask 458112
    %v1132 = vsel %vm1131, %v1130, %v1128
    %v1133 = vadd.s32 %v1107, 4294967240
    %v1134 = vperm.slane %v937, %v1133
    %vm1135 = vcmask 523712
    %v1136 = vsel %vm1135, %v1134, %v1132
    %v1137 = vadd.s32 %v1107, 4294967232
    %v1138 = vperm.slane %v940, %v1137
    %vm1139 = vcmask 589312
    %v1140 = vsel %vm1139, %v1138, %v1136
    %v1141 = vadd.s32 %v1107, 4294967224
    %v1142 = vperm.slane %v943, %v1141
    %vm1143 = vcmask 654912
    %v1144 = vsel %vm1143, %v1142, %v1140
    %v1145 = vadd.s32 %v1107, 4294967216
    %v1146 = vperm.slane %v946, %v1145
    %vm1147 = vcmask 720512
    %v1148 = vsel %vm1147, %v1146, %v1144
    %v1149 = vadd.s32 %v1107, 4294967208
    %v1150 = vperm.slane %v949, %v1149
    %vm1151 = vcmask 786112
    %v1152 = vsel %vm1151, %v1150, %v1148
    %v1153 = vadd.s32 %v1107, 4294967200
    %v1154 = vperm.slane %v952, %v1153
    %vm1155 = vcmask 851712
    %v1156 = vsel %vm1155, %v1154, %v1152
    %v1157 = vadd.s32 %v1107, 4294967192
    %v1158 = vperm.slane %v955, %v1157
    %vm1159 = vcmask 917312
    %v1160 = vsel %vm1159, %v1158, %v1156
    %v1161 = vadd.s32 %v1107, 4294967184
    %v1162 = vperm.slane %v958, %v1161
    %vm1163 = vcmask 982912
    %v1164 = vsel %vm1163, %v1162, %v1160
    %v1165 = vadd.s32 %v1107, 4294967176
    %v1166 = vperm.slane %v961, %v1165
    %vm1167 = vcmask 1048512
    %v1168 = vsel %vm1167, %v1166, %v1164
    %v1169 = vperm.slane %v964, %v1107
    %v1170 = vperm.slane %v967, %v1109
    %v1171 = vsel %vm1111, %v1170, %v1169
    %v1172 = vperm.slane %v970, %v1113
    %v1173 = vsel %vm1115, %v1172, %v1171
    %v1174 = vperm.slane %v973, %v1117
    %v1175 = vsel %vm1119, %v1174, %v1173
    %v1176 = vperm.slane %v976, %v1121
    %v1177 = vsel %vm1123, %v1176, %v1175
    %v1178 = vperm.slane %v979, %v1125
    %v1179 = vsel %vm1127, %v1178, %v1177
    %v1180 = vperm.slane %v982, %v1129
    %v1181 = vsel %vm1131, %v1180, %v1179
    %v1182 = vperm.slane %v985, %v1133
    %v1183 = vsel %vm1135, %v1182, %v1181
    %v1184 = vperm.slane %v988, %v1137
    %v1185 = vsel %vm1139, %v1184, %v1183
    %v1186 = vperm.slane %v991, %v1141
    %v1187 = vsel %vm1143, %v1186, %v1185
    %v1188 = vperm.slane %v994, %v1145
    %v1189 = vsel %vm1147, %v1188, %v1187
    %v1190 = vperm.slane %v997, %v1149
    %v1191 = vsel %vm1151, %v1190, %v1189
    %v1192 = vperm.slane %v1000, %v1153
    %v1193 = vsel %vm1155, %v1192, %v1191
    %v1194 = vperm.slane %v1003, %v1157
    %v1195 = vsel %vm1159, %v1194, %v1193
    %v1196 = vperm.slane %v1006, %v1161
    %v1197 = vsel %vm1163, %v1196, %v1195
    %v1198 = vperm.slane %v1009, %v1165
    %v1199 = vsel %vm1167, %v1198, %v1197
    %v1200 = vperm.slane %v1012, %v1107
    %v1201 = vperm.slane %v1015, %v1109
    %v1202 = vsel %vm1111, %v1201, %v1200
    %v1203 = vperm.slane %v1018, %v1113
    %v1204 = vsel %vm1115, %v1203, %v1202
    %v1205 = vperm.slane %v1021, %v1117
    %v1206 = vsel %vm1119, %v1205, %v1204
    %v1207 = vperm.slane %v1024, %v1121
    %v1208 = vsel %vm1123, %v1207, %v1206
    %v1209 = vperm.slane %v1027, %v1125
    %v1210 = vsel %vm1127, %v1209, %v1208
    %v1211 = vperm.slane %v1030, %v1129
    %v1212 = vsel %vm1131, %v1211, %v1210
    %v1213 = vperm.slane %v1033, %v1133
    %v1214 = vsel %vm1135, %v1213, %v1212
    %v1215 = vperm.slane %v1036, %v1137
    %v1216 = vsel %vm1139, %v1215, %v1214
    %v1217 = vperm.slane %v1039, %v1141
    %v1218 = vsel %vm1143, %v1217, %v1216
    %v1219 = vperm.slane %v1042, %v1145
    %v1220 = vsel %vm1147, %v1219, %v1218
    %v1221 = vperm.slane %v1045, %v1149
    %v1222 = vsel %vm1151, %v1221, %v1220
    %v1223 = vperm.slane %v1048, %v1153
    %v1224 = vsel %vm1155, %v1223, %v1222
    %v1225 = vperm.slane %v1051, %v1157
    %v1226 = vsel %vm1159, %v1225, %v1224
    %v1227 = vperm.slane %v1054, %v1161
    %v1228 = vsel %vm1163, %v1227, %v1226
    %v1229 = vperm.slane %v1057, %v1165
    %v1230 = vsel %vm1167, %v1229, %v1228
    %v1231 = vperm.slane %v1060, %v1107
    %v1232 = vperm.slane %v1063, %v1109
    %v1233 = vsel %vm1111, %v1232, %v1231
    %v1234 = vperm.slane %v1066, %v1113
    %v1235 = vsel %vm1115, %v1234, %v1233
    %v1236 = vperm.slane %v1069, %v1117
    %v1237 = vsel %vm1119, %v1236, %v1235
    %v1238 = vperm.slane %v1072, %v1121
    %v1239 = vsel %vm1123, %v1238, %v1237
    %v1240 = vperm.slane %v1075, %v1125
    %v1241 = vsel %vm1127, %v1240, %v1239
    %v1242 = vperm.slane %v1078, %v1129
    %v1243 = vsel %vm1131, %v1242, %v1241
    %v1244 = vperm.slane %v1081, %v1133
    %v1245 = vsel %vm1135, %v1244, %v1243
    %v1246 = vperm.slane %v1084, %v1137
    %v1247 = vsel %vm1139, %v1246, %v1245
    %v1248 = vperm.slane %v1087, %v1141
    %v1249 = vsel %vm1143, %v1248, %v1247
    %v1250 = vperm.slane %v1090, %v1145
    %v1251 = vsel %vm1147, %v1250, %v1249
    %v1252 = vperm.slane %v1093, %v1149
    %v1253 = vsel %vm1151, %v1252, %v1251
    %v1254 = vperm.slane %v1096, %v1153
    %v1255 = vsel %vm1155, %v1254, %v1253
    %v1256 = vperm.slane %v1099, %v1157
    %v1257 = vsel %vm1159, %v1256, %v1255
    %v1258 = vperm.slane %v1102, %v1161
    %v1259 = vsel %vm1163, %v1258, %v1257
    %v1260 = vperm.slane %v1105, %v1165
    %v1261 = vsel %vm1167, %v1260, %v1259
    %1266 = vst [vmem:[#allocation8] sm:$0x1] %v1168
    %1267 = vst [vmem:[#allocation8 + $0x2] sm:$0x1] %v1199
    %1268 = vst [vmem:[#allocation8 + $0x4] sm:$0x1] %v1230
    %1269 = vst [vmem:[#allocation8 + $0x6] sm:$0x1] %v1261
    %v1270 = vperm.slane %v130, 1
    %v1271 = vperm.slane %v131, 1
    %v1272 = vperm.slane %v132, 1
    %v1273 = vperm.slane %v133, 1
    %v1274 = vmul.f32 %v62, %v1270
    %v1275 = vmul.f32 %v63, %v1270
    %v1276 = vmul.f32 %v64, %v1270
    %v1277 = vmul.f32 %v65, %v1270
    %v1278 = vmul.f32 %v66, %v1270
    %v1279 = vmul.f32 %v67, %v1270
    %v1280 = vmul.f32 %v68, %v1270
    %v1281 = vmul.f32 %v69, %v1270
    %v1282 = vmul.f32 %v70, %v1270
    %v1283 = vmul.f32 %v71, %v1270
    %v1284 = vmul.f32 %v72, %v1270
    %v1285 = vmul.f32 %v73, %v1270
    %v1286 = vmul.f32 %v74, %v1270
    %v1287 = vmul.f32 %v75, %v1270
    %v1288 = vmul.f32 %v76, %v1270
    %v1289 = vmul.f32 %v77, %v1270
    %v1290 = vmul.f32 %v78, %v1271
    %v1291 = vmul.f32 %v79, %v1271
    %v1292 = vmul.f32 %v80, %v1271
    %v1293 = vmul.f32 %v81, %v1271
    %v1294 = vmul.f32 %v82, %v1271
    %v1295 = vmul.f32 %v83, %v1271
    %v1296 = vmul.f32 %v84, %v1271
    %v1297 = vmul.f32 %v85, %v1271
    %v1298 = vmul.f32 %v86, %v1271
    %v1299 = vmul.f32 %v87, %v1271
    %v1300 = vmul.f32 %v88, %v1271
    %v1301 = vmul.f32 %v89, %v1271
    %v1302 = vmul.f32 %v90, %v1271
    %v1303 = vmul.f32 %v91, %v1271
    %v1304 = vmul.f32 %v92, %v1271
    %v1305 = vmul.f32 %v93, %v1271
    %v1306 = vmul.f32 %v94, %v1272
    %v1307 = vmul.f32 %v95, %v1272
    %v1308 = vmul.f32 %v96, %v1272
    %v1309 = vmul.f32 %v97, %v1272
    %v1310 = vmul.f32 %v98, %v1272
    %v1311 = vmul.f32 %v99, %v1272
    %v1312 = vmul.f32 %v100, %v1272
    %v1313 = vmul.f32 %v101, %v1272
    %v1314 = vmul.f32 %v102, %v1272
    %v1315 = vmul.f32 %v103, %v1272
    %v1316 = vmul.f32 %v104, %v1272
    %v1317 = vmul.f32 %v105, %v1272
    %v1318 = vmul.f32 %v106, %v1272
    %v1319 = vmul.f32 %v107, %v1272
    %v1320 = vmul.f32 %v108, %v1272
    %v1321 = vmul.f32 %v109, %v1272
    %v1322 = vmul.f32 %v110, %v1273
    %v1323 = vmul.f32 %v111, %v1273
    %v1324 = vmul.f32 %v112, %v1273
    %v1325 = vmul.f32 %v113, %v1273
    %v1326 = vmul.f32 %v114, %v1273
    %v1327 = vmul.f32 %v115, %v1273
    %v1328 = vmul.f32 %v116, %v1273
    %v1329 = vmul.f32 %v117, %v1273
    %v1330 = vmul.f32 %v118, %v1273
    %v1331 = vmul.f32 %v119, %v1273
    %v1332 = vmul.f32 %v120, %v1273
    %v1333 = vmul.f32 %v121, %v1273
    %v1334 = vmul.f32 %v122, %v1273
    %v1335 = vmul.f32 %v123, %v1273
    %v1336 = vmul.f32 %v124, %v1273
    %v1337 = vmul.f32 %v125, %v1273
    %1338 = vadd.xlane.f32.xlu0 %v1274
    %v1339 = vpop.xlane.xlu0 %1338
    %1340 = vadd.xlane.f32.xlu0 %v1275
    %v1341 = vpop.xlane.xlu0 %1340
    %1342 = vadd.xlane.f32.xlu0 %v1276
    %v1343 = vpop.xlane.xlu0 %1342
    %1344 = vadd.xlane.f32.xlu0 %v1277
    %v1345 = vpop.xlane.xlu0 %1344
    %1346 = vadd.xlane.f32.xlu0 %v1278
    %v1347 = vpop.xlane.xlu0 %1346
    %1348 = vadd.xlane.f32.xlu0 %v1279
    %v1349 = vpop.xlane.xlu0 %1348
    %1350 = vadd.xlane.f32.xlu0 %v1280
    %v1351 = vpop.xlane.xlu0 %1350
    %1352 = vadd.xlane.f32.xlu0 %v1281
    %v1353 = vpop.xlane.xlu0 %1352
    %1354 = vadd.xlane.f32.xlu0 %v1282
    %v1355 = vpop.xlane.xlu0 %1354
    %1356 = vadd.xlane.f32.xlu0 %v1283
    %v1357 = vpop.xlane.xlu0 %1356
    %1358 = vadd.xlane.f32.xlu0 %v1284
    %v1359 = vpop.xlane.xlu0 %1358
    %1360 = vadd.xlane.f32.xlu0 %v1285
    %v1361 = vpop.xlane.xlu0 %1360
    %1362 = vadd.xlane.f32.xlu0 %v1286
    %v1363 = vpop.xlane.xlu0 %1362
    %1364 = vadd.xlane.f32.xlu0 %v1287
    %v1365 = vpop.xlane.xlu0 %1364
    %1366 = vadd.xlane.f32.xlu0 %v1288
    %v1367 = vpop.xlane.xlu0 %1366
    %1368 = vadd.xlane.f32.xlu0 %v1289
    %v1369 = vpop.xlane.xlu0 %1368
    %1370 = vadd.xlane.f32.xlu0 %v1290
    %v1371 = vpop.xlane.xlu0 %1370
    %1372 = vadd.xlane.f32.xlu0 %v1291
    %v1373 = vpop.xlane.xlu0 %1372
    %1374 = vadd.xlane.f32.xlu0 %v1292
    %v1375 = vpop.xlane.xlu0 %1374
    %1376 = vadd.xlane.f32.xlu0 %v1293
    %v1377 = vpop.xlane.xlu0 %1376
    %1378 = vadd.xlane.f32.xlu0 %v1294
    %v1379 = vpop.xlane.xlu0 %1378
    %1380 = vadd.xlane.f32.xlu0 %v1295
    %v1381 = vpop.xlane.xlu0 %1380
    %1382 = vadd.xlane.f32.xlu0 %v1296
    %v1383 = vpop.xlane.xlu0 %1382
    %1384 = vadd.xlane.f32.xlu0 %v1297
    %v1385 = vpop.xlane.xlu0 %1384
    %1386 = vadd.xlane.f32.xlu0 %v1298
    %v1387 = vpop.xlane.xlu0 %1386
    %1388 = vadd.xlane.f32.xlu0 %v1299
    %v1389 = vpop.xlane.xlu0 %1388
    %1390 = vadd.xlane.f32.xlu0 %v1300
    %v1391 = vpop.xlane.xlu0 %1390
    %1392 = vadd.xlane.f32.xlu0 %v1301
    %v1393 = vpop.xlane.xlu0 %1392
    %1394 = vadd.xlane.f32.xlu0 %v1302
    %v1395 = vpop.xlane.xlu0 %1394
    %1396 = vadd.xlane.f32.xlu0 %v1303
    %v1397 = vpop.xlane.xlu0 %1396
    %1398 = vadd.xlane.f32.xlu0 %v1304
    %v1399 = vpop.xlane.xlu0 %1398
    %1400 = vadd.xlane.f32.xlu0 %v1305
    %v1401 = vpop.xlane.xlu0 %1400
    %1402 = vadd.xlane.f32.xlu0 %v1306
    %v1403 = vpop.xlane.xlu0 %1402
    %1404 = vadd.xlane.f32.xlu0 %v1307
    %v1405 = vpop.xlane.xlu0 %1404
    %1406 = vadd.xlane.f32.xlu0 %v1308
    %v1407 = vpop.xlane.xlu0 %1406
    %1408 = vadd.xlane.f32.xlu0 %v1309
    %v1409 = vpop.xlane.xlu0 %1408
    %1410 = vadd.xlane.f32.xlu0 %v1310
    %v1411 = vpop.xlane.xlu0 %1410
    %1412 = vadd.xlane.f32.xlu0 %v1311
    %v1413 = vpop.xlane.xlu0 %1412
    %1414 = vadd.xlane.f32.xlu0 %v1312
    %v1415 = vpop.xlane.xlu0 %1414
    %1416 = vadd.xlane.f32.xlu0 %v1313
    %v1417 = vpop.xlane.xlu0 %1416
    %1418 = vadd.xlane.f32.xlu0 %v1314
    %v1419 = vpop.xlane.xlu0 %1418
    %1420 = vadd.xlane.f32.xlu0 %v1315
    %v1421 = vpop.xlane.xlu0 %1420
    %1422 = vadd.xlane.f32.xlu0 %v1316
    %v1423 = vpop.xlane.xlu0 %1422
    %1424 = vadd.xlane.f32.xlu0 %v1317
    %v1425 = vpop.xlane.xlu0 %1424
    %1426 = vadd.xlane.f32.xlu0 %v1318
    %v1427 = vpop.xlane.xlu0 %1426
    %1428 = vadd.xlane.f32.xlu0 %v1319
    %v1429 = vpop.xlane.xlu0 %1428
    %1430 = vadd.xlane.f32.xlu0 %v1320
    %v1431 = vpop.xlane.xlu0 %1430
    %1432 = vadd.xlane.f32.xlu0 %v1321
    %v1433 = vpop.xlane.xlu0 %1432
    %1434 = vadd.xlane.f32.xlu0 %v1322
    %v1435 = vpop.xlane.xlu0 %1434
    %1436 = vadd.xlane.f32.xlu0 %v1323
    %v1437 = vpop.xlane.xlu0 %1436
    %1438 = vadd.xlane.f32.xlu0 %v1324
    %v1439 = vpop.xlane.xlu0 %1438
    %1440 = vadd.xlane.f32.xlu0 %v1325
    %v1441 = vpop.xlane.xlu0 %1440
    %1442 = vadd.xlane.f32.xlu0 %v1326
    %v1443 = vpop.xlane.xlu0 %1442
    %1444 = vadd.xlane.f32.xlu0 %v1327
    %v1445 = vpop.xlane.xlu0 %1444
    %1446 = vadd.xlane.f32.xlu0 %v1328
    %v1447 = vpop.xlane.xlu0 %1446
    %1448 = vadd.xlane.f32.xlu0 %v1329
    %v1449 = vpop.xlane.xlu0 %1448
    %1450 = vadd.xlane.f32.xlu0 %v1330
    %v1451 = vpop.xlane.xlu0 %1450
    %1452 = vadd.xlane.f32.xlu0 %v1331
    %v1453 = vpop.xlane.xlu0 %1452
    %1454 = vadd.xlane.f32.xlu0 %v1332
    %v1455 = vpop.xlane.xlu0 %1454
    %1456 = vadd.xlane.f32.xlu0 %v1333
    %v1457 = vpop.xlane.xlu0 %1456
    %1458 = vadd.xlane.f32.xlu0 %v1334
    %v1459 = vpop.xlane.xlu0 %1458
    %1460 = vadd.xlane.f32.xlu0 %v1335
    %v1461 = vpop.xlane.xlu0 %1460
    %1462 = vadd.xlane.f32.xlu0 %v1336
    %v1463 = vpop.xlane.xlu0 %1462
    %1464 = vadd.xlane.f32.xlu0 %v1337
    %v1465 = vpop.xlane.xlu0 %1464
    %v1466 = vperm.slane %v126, 1
    %v1467 = vlaneseq
    %v1468 = vshrl.u32 %v1467, 7
    %1470 = vset.pattern.permute.xlu0 %v1468
    %1471 = vperm.xlu0 %1470, %v1466
    %v1472 = vpop.permute.xlu0 %1471
    %v1473 = vlaneseq
    %v1474 = vshrl.u32 %v1473, 7
    %v1475 = vadd.s32 %v1474, 8
    %1476 = vset.pattern.permute.xlu0 %v1475
    %1477 = vperm.xlu0 %1476, %v1466
    %v1478 = vpop.permute.xlu0 %1477
    %v1479 = vlaneseq
    %v1480 = vshrl.u32 %v1479, 7
    %v1481 = vadd.s32 %v1480, 16
    %1482 = vset.pattern.permute.xlu0 %v1481
    %1483 = vperm.xlu0 %1482, %v1466
    %v1484 = vpop.permute.xlu0 %1483
    %v1485 = vlaneseq
    %v1486 = vshrl.u32 %v1485, 7
    %v1487 = vadd.s32 %v1486, 24
    %1488 = vset.pattern.permute.xlu0 %v1487
    %1489 = vperm.xlu0 %1488, %v1466
    %v1490 = vpop.permute.xlu0 %1489
    %v1491 = vlaneseq
    %v1492 = vshrl.u32 %v1491, 7
    %v1493 = vadd.s32 %v1492, 32
    %1494 = vset.pattern.permute.xlu0 %v1493
    %1495 = vperm.xlu0 %1494, %v1466
    %v1496 = vpop.permute.xlu0 %1495
    %v1497 = vlaneseq
    %v1498 = vshrl.u32 %v1497, 7
    %v1499 = vadd.s32 %v1498, 40
    %1500 = vset.pattern.permute.xlu0 %v1499
    %1501 = vperm.xlu0 %1500, %v1466
    %v1502 = vpop.permute.xlu0 %1501
    %v1503 = vlaneseq
    %v1504 = vshrl.u32 %v1503, 7
    %v1505 = vadd.s32 %v1504, 48
    %1506 = vset.pattern.permute.xlu0 %v1505
    %1507 = vperm.xlu0 %1506, %v1466
    %v1508 = vpop.permute.xlu0 %1507
    %v1509 = vlaneseq
    %v1510 = vshrl.u32 %v1509, 7
    %v1511 = vadd.s32 %v1510, 56
    %1512 = vset.pattern.permute.xlu0 %v1511
    %1513 = vperm.xlu0 %1512, %v1466
    %v1514 = vpop.permute.xlu0 %1513
    %v1515 = vlaneseq
    %v1516 = vshrl.u32 %v1515, 7
    %v1517 = vadd.s32 %v1516, 64
    %1518 = vset.pattern.permute.xlu0 %v1517
    %1519 = vperm.xlu0 %1518, %v1466
    %v1520 = vpop.permute.xlu0 %1519
    %v1521 = vlaneseq
    %v1522 = vshrl.u32 %v1521, 7
    %v1523 = vadd.s32 %v1522, 72
    %1524 = vset.pattern.permute.xlu0 %v1523
    %1525 = vperm.xlu0 %1524, %v1466
    %v1526 = vpop.permute.xlu0 %1525
    %v1527 = vlaneseq
    %v1528 = vshrl.u32 %v1527, 7
    %v1529 = vadd.s32 %v1528, 80
    %1530 = vset.pattern.permute.xlu0 %v1529
    %1531 = vperm.xlu0 %1530, %v1466
    %v1532 = vpop.permute.xlu0 %1531
    %v1533 = vlaneseq
    %v1534 = vshrl.u32 %v1533, 7
    %v1535 = vadd.s32 %v1534, 88
    %1536 = vset.pattern.permute.xlu0 %v1535
    %1537 = vperm.xlu0 %1536, %v1466
    %v1538 = vpop.permute.xlu0 %1537
    %v1539 = vlaneseq
    %v1540 = vshrl.u32 %v1539, 7
    %v1541 = vadd.s32 %v1540, 96
    %1542 = vset.pattern.permute.xlu0 %v1541
    %1543 = vperm.xlu0 %1542, %v1466
    %v1544 = vpop.permute.xlu0 %1543
    %v1545 = vlaneseq
    %v1546 = vshrl.u32 %v1545, 7
    %v1547 = vadd.s32 %v1546, 104
    %1548 = vset.pattern.permute.xlu0 %v1547
    %1549 = vperm.xlu0 %1548, %v1466
    %v1550 = vpop.permute.xlu0 %1549
    %v1551 = vlaneseq
    %v1552 = vshrl.u32 %v1551, 7
    %v1553 = vadd.s32 %v1552, 112
    %1554 = vset.pattern.permute.xlu0 %v1553
    %1555 = vperm.xlu0 %1554, %v1466
    %v1556 = vpop.permute.xlu0 %1555
    %v1557 = vlaneseq
    %v1558 = vshrl.u32 %v1557, 7
    %v1559 = vadd.s32 %v1558, 120
    %1560 = vset.pattern.permute.xlu0 %v1559
    %1561 = vperm.xlu0 %1560, %v1466
    %v1562 = vpop.permute.xlu0 %1561
    %v1563 = vperm.slane %v127, 1
    %v1564 = vlaneseq
    %v1565 = vshrl.u32 %v1564, 7
    %1567 = vset.pattern.permute.xlu0 %v1565
    %1568 = vperm.xlu0 %1567, %v1563
    %v1569 = vpop.permute.xlu0 %1568
    %v1570 = vlaneseq
    %v1571 = vshrl.u32 %v1570, 7
    %v1572 = vadd.s32 %v1571, 8
    %1573 = vset.pattern.permute.xlu0 %v1572
    %1574 = vperm.xlu0 %1573, %v1563
    %v1575 = vpop.permute.xlu0 %1574
    %v1576 = vlaneseq
    %v1577 = vshrl.u32 %v1576, 7
    %v1578 = vadd.s32 %v1577, 16
    %1579 = vset.pattern.permute.xlu0 %v1578
    %1580 = vperm.xlu0 %1579, %v1563
    %v1581 = vpop.permute.xlu0 %1580
    %v1582 = vlaneseq
    %v1583 = vshrl.u32 %v1582, 7
    %v1584 = vadd.s32 %v1583, 24
    %1585 = vset.pattern.permute.xlu0 %v1584
    %1586 = vperm.xlu0 %1585, %v1563
    %v1587 = vpop.permute.xlu0 %1586
    %v1588 = vlaneseq
    %v1589 = vshrl.u32 %v1588, 7
    %v1590 = vadd.s32 %v1589, 32
    %1591 = vset.pattern.permute.xlu0 %v1590
    %1592 = vperm.xlu0 %1591, %v1563
    %v1593 = vpop.permute.xlu0 %1592
    %v1594 = vlaneseq
    %v1595 = vshrl.u32 %v1594, 7
    %v1596 = vadd.s32 %v1595, 40
    %1597 = vset.pattern.permute.xlu0 %v1596
    %1598 = vperm.xlu0 %1597, %v1563
    %v1599 = vpop.permute.xlu0 %1598
    %v1600 = vlaneseq
    %v1601 = vshrl.u32 %v1600, 7
    %v1602 = vadd.s32 %v1601, 48
    %1603 = vset.pattern.permute.xlu0 %v1602
    %1604 = vperm.xlu0 %1603, %v1563
    %v1605 = vpop.permute.xlu0 %1604
    %v1606 = vlaneseq
    %v1607 = vshrl.u32 %v1606, 7
    %v1608 = vadd.s32 %v1607, 56
    %1609 = vset.pattern.permute.xlu0 %v1608
    %1610 = vperm.xlu0 %1609, %v1563
    %v1611 = vpop.permute.xlu0 %1610
    %v1612 = vlaneseq
    %v1613 = vshrl.u32 %v1612, 7
    %v1614 = vadd.s32 %v1613, 64
    %1615 = vset.pattern.permute.xlu0 %v1614
    %1616 = vperm.xlu0 %1615, %v1563
    %v1617 = vpop.permute.xlu0 %1616
    %v1618 = vlaneseq
    %v1619 = vshrl.u32 %v1618, 7
    %v1620 = vadd.s32 %v1619, 72
    %1621 = vset.pattern.permute.xlu0 %v1620
    %1622 = vperm.xlu0 %1621, %v1563
    %v1623 = vpop.permute.xlu0 %1622
    %v1624 = vlaneseq
    %v1625 = vshrl.u32 %v1624, 7
    %v1626 = vadd.s32 %v1625, 80
    %1627 = vset.pattern.permute.xlu0 %v1626
    %1628 = vperm.xlu0 %1627, %v1563
    %v1629 = vpop.permute.xlu0 %1628
    %v1630 = vlaneseq
    %v1631 = vshrl.u32 %v1630, 7
    %v1632 = vadd.s32 %v1631, 88
    %1633 = vset.pattern.permute.xlu0 %v1632
    %1634 = vperm.xlu0 %1633, %v1563
    %v1635 = vpop.permute.xlu0 %1634
    %v1636 = vlaneseq
    %v1637 = vshrl.u32 %v1636, 7
    %v1638 = vadd.s32 %v1637, 96
    %1639 = vset.pattern.permute.xlu0 %v1638
    %1640 = vperm.xlu0 %1639, %v1563
    %v1641 = vpop.permute.xlu0 %1640
    %v1642 = vlaneseq
    %v1643 = vshrl.u32 %v1642, 7
    %v1644 = vadd.s32 %v1643, 104
    %1645 = vset.pattern.permute.xlu0 %v1644
    %1646 = vperm.xlu0 %1645, %v1563
    %v1647 = vpop.permute.xlu0 %1646
    %v1648 = vlaneseq
    %v1649 = vshrl.u32 %v1648, 7
    %v1650 = vadd.s32 %v1649, 112
    %1651 = vset.pattern.permute.xlu0 %v1650
    %1652 = vperm.xlu0 %1651, %v1563
    %v1653 = vpop.permute.xlu0 %1652
    %v1654 = vlaneseq
    %v1655 = vshrl.u32 %v1654, 7
    %v1656 = vadd.s32 %v1655, 120
    %1657 = vset.pattern.permute.xlu0 %v1656
    %1658 = vperm.xlu0 %1657, %v1563
    %v1659 = vpop.permute.xlu0 %1658
    %v1660 = vperm.slane %v128, 1
    %v1661 = vlaneseq
    %v1662 = vshrl.u32 %v1661, 7
    %1664 = vset.pattern.permute.xlu0 %v1662
    %1665 = vperm.xlu0 %1664, %v1660
    %v1666 = vpop.permute.xlu0 %1665
    %v1667 = vlaneseq
    %v1668 = vshrl.u32 %v1667, 7
    %v1669 = vadd.s32 %v1668, 8
    %1670 = vset.pattern.permute.xlu0 %v1669
    %1671 = vperm.xlu0 %1670, %v1660
    %v1672 = vpop.permute.xlu0 %1671
    %v1673 = vlaneseq
    %v1674 = vshrl.u32 %v1673, 7
    %v1675 = vadd.s32 %v1674, 16
    %1676 = vset.pattern.permute.xlu0 %v1675
    %1677 = vperm.xlu0 %1676, %v1660
    %v1678 = vpop.permute.xlu0 %1677
    %v1679 = vlaneseq
    %v1680 = vshrl.u32 %v1679, 7
    %v1681 = vadd.s32 %v1680, 24
    %1682 = vset.pattern.permute.xlu0 %v1681
    %1683 = vperm.xlu0 %1682, %v1660
    %v1684 = vpop.permute.xlu0 %1683
    %v1685 = vlaneseq
    %v1686 = vshrl.u32 %v1685, 7
    %v1687 = vadd.s32 %v1686, 32
    %1688 = vset.pattern.permute.xlu0 %v1687
    %1689 = vperm.xlu0 %1688, %v1660
    %v1690 = vpop.permute.xlu0 %1689
    %v1691 = vlaneseq
    %v1692 = vshrl.u32 %v1691, 7
    %v1693 = vadd.s32 %v1692, 40
    %1694 = vset.pattern.permute.xlu0 %v1693
    %1695 = vperm.xlu0 %1694, %v1660
    %v1696 = vpop.permute.xlu0 %1695
    %v1697 = vlaneseq
    %v1698 = vshrl.u32 %v1697, 7
    %v1699 = vadd.s32 %v1698, 48
    %1700 = vset.pattern.permute.xlu0 %v1699
    %1701 = vperm.xlu0 %1700, %v1660
    %v1702 = vpop.permute.xlu0 %1701
    %v1703 = vlaneseq
    %v1704 = vshrl.u32 %v1703, 7
    %v1705 = vadd.s32 %v1704, 56
    %1706 = vset.pattern.permute.xlu0 %v1705
    %1707 = vperm.xlu0 %1706, %v1660
    %v1708 = vpop.permute.xlu0 %1707
    %v1709 = vlaneseq
    %v1710 = vshrl.u32 %v1709, 7
    %v1711 = vadd.s32 %v1710, 64
    %1712 = vset.pattern.permute.xlu0 %v1711
    %1713 = vperm.xlu0 %1712, %v1660
    %v1714 = vpop.permute.xlu0 %1713
    %v1715 = vlaneseq
    %v1716 = vshrl.u32 %v1715, 7
    %v1717 = vadd.s32 %v1716, 72
    %1718 = vset.pattern.permute.xlu0 %v1717
    %1719 = vperm.xlu0 %1718, %v1660
    %v1720 = vpop.permute.xlu0 %1719
    %v1721 = vlaneseq
    %v1722 = vshrl.u32 %v1721, 7
    %v1723 = vadd.s32 %v1722, 80
    %1724 = vset.pattern.permute.xlu0 %v1723
    %1725 = vperm.xlu0 %1724, %v1660
    %v1726 = vpop.permute.xlu0 %1725
    %v1727 = vlaneseq
    %v1728 = vshrl.u32 %v1727, 7
    %v1729 = vadd.s32 %v1728, 88
    %1730 = vset.pattern.permute.xlu0 %v1729
    %1731 = vperm.xlu0 %1730, %v1660
    %v1732 = vpop.permute.xlu0 %1731
    %v1733 = vlaneseq
    %v1734 = vshrl.u32 %v1733, 7
    %v1735 = vadd.s32 %v1734, 96
    %1736 = vset.pattern.permute.xlu0 %v1735
    %1737 = vperm.xlu0 %1736, %v1660
    %v1738 = vpop.permute.xlu0 %1737
    %v1739 = vlaneseq
    %v1740 = vshrl.u32 %v1739, 7
    %v1741 = vadd.s32 %v1740, 104
    %1742 = vset.pattern.permute.xlu0 %v1741
    %1743 = vperm.xlu0 %1742, %v1660
    %v1744 = vpop.permute.xlu0 %1743
    %v1745 = vlaneseq
    %v1746 = vshrl.u32 %v1745, 7
    %v1747 = vadd.s32 %v1746, 112
    %1748 = vset.pattern.permute.xlu0 %v1747
    %1749 = vperm.xlu0 %1748, %v1660
    %v1750 = vpop.permute.xlu0 %1749
    %v1751 = vlaneseq
    %v1752 = vshrl.u32 %v1751, 7
    %v1753 = vadd.s32 %v1752, 120
    %1754 = vset.pattern.permute.xlu0 %v1753
    %1755 = vperm.xlu0 %1754, %v1660
    %v1756 = vpop.permute.xlu0 %1755
    %v1757 = vperm.slane %v129, 1
    %v1758 = vlaneseq
    %v1759 = vshrl.u32 %v1758, 7
    %1761 = vset.pattern.permute.xlu0 %v1759
    %1762 = vperm.xlu0 %1761, %v1757
    %v1763 = vpop.permute.xlu0 %1762
    %v1764 = vlaneseq
    %v1765 = vshrl.u32 %v1764, 7
    %v1766 = vadd.s32 %v1765, 8
    %1767 = vset.pattern.permute.xlu0 %v1766
    %1768 = vperm.xlu0 %1767, %v1757
    %v1769 = vpop.permute.xlu0 %1768
    %v1770 = vlaneseq
    %v1771 = vshrl.u32 %v1770, 7
    %v1772 = vadd.s32 %v1771, 16
    %1773 = vset.pattern.permute.xlu0 %v1772
    %1774 = vperm.xlu0 %1773, %v1757
    %v1775 = vpop.permute.xlu0 %1774
    %v1776 = vlaneseq
    %v1777 = vshrl.u32 %v1776, 7
    %v1778 = vadd.s32 %v1777, 24
    %1779 = vset.pattern.permute.xlu0 %v1778
    %1780 = vperm.xlu0 %1779, %v1757
    %v1781 = vpop.permute.xlu0 %1780
    %v1782 = vlaneseq
    %v1783 = vshrl.u32 %v1782, 7
    %v1784 = vadd.s32 %v1783, 32
    %1785 = vset.pattern.permute.xlu0 %v1784
    %1786 = vperm.xlu0 %1785, %v1757
    %v1787 = vpop.permute.xlu0 %1786
    %v1788 = vlaneseq
    %v1789 = vshrl.u32 %v1788, 7
    %v1790 = vadd.s32 %v1789, 40
    %1791 = vset.pattern.permute.xlu0 %v1790
    %1792 = vperm.xlu0 %1791, %v1757
    %v1793 = vpop.permute.xlu0 %1792
    %v1794 = vlaneseq
    %v1795 = vshrl.u32 %v1794, 7
    %v1796 = vadd.s32 %v1795, 48
    %1797 = vset.pattern.permute.xlu0 %v1796
    %1798 = vperm.xlu0 %1797, %v1757
    %v1799 = vpop.permute.xlu0 %1798
    %v1800 = vlaneseq
    %v1801 = vshrl.u32 %v1800, 7
    %v1802 = vadd.s32 %v1801, 56
    %1803 = vset.pattern.permute.xlu0 %v1802
    %1804 = vperm.xlu0 %1803, %v1757
    %v1805 = vpop.permute.xlu0 %1804
    %v1806 = vlaneseq
    %v1807 = vshrl.u32 %v1806, 7
    %v1808 = vadd.s32 %v1807, 64
    %1809 = vset.pattern.permute.xlu0 %v1808
    %1810 = vperm.xlu0 %1809, %v1757
    %v1811 = vpop.permute.xlu0 %1810
    %v1812 = vlaneseq
    %v1813 = vshrl.u32 %v1812, 7
    %v1814 = vadd.s32 %v1813, 72
    %1815 = vset.pattern.permute.xlu0 %v1814
    %1816 = vperm.xlu0 %1815, %v1757
    %v1817 = vpop.permute.xlu0 %1816
    %v1818 = vlaneseq
    %v1819 = vshrl.u32 %v1818, 7
    %v1820 = vadd.s32 %v1819, 80
    %1821 = vset.pattern.permute.xlu0 %v1820
    %1822 = vperm.xlu0 %1821, %v1757
    %v1823 = vpop.permute.xlu0 %1822
    %v1824 = vlaneseq
    %v1825 = vshrl.u32 %v1824, 7
    %v1826 = vadd.s32 %v1825, 88
    %1827 = vset.pattern.permute.xlu0 %v1826
    %1828 = vperm.xlu0 %1827, %v1757
    %v1829 = vpop.permute.xlu0 %1828
    %v1830 = vlaneseq
    %v1831 = vshrl.u32 %v1830, 7
    %v1832 = vadd.s32 %v1831, 96
    %1833 = vset.pattern.permute.xlu0 %v1832
    %1834 = vperm.xlu0 %1833, %v1757
    %v1835 = vpop.permute.xlu0 %1834
    %v1836 = vlaneseq
    %v1837 = vshrl.u32 %v1836, 7
    %v1838 = vadd.s32 %v1837, 104
    %1839 = vset.pattern.permute.xlu0 %v1838
    %1840 = vperm.xlu0 %1839, %v1757
    %v1841 = vpop.permute.xlu0 %1840
    %v1842 = vlaneseq
    %v1843 = vshrl.u32 %v1842, 7
    %v1844 = vadd.s32 %v1843, 112
    %1845 = vset.pattern.permute.xlu0 %v1844
    %1846 = vperm.xlu0 %1845, %v1757
    %v1847 = vpop.permute.xlu0 %1846
    %v1848 = vlaneseq
    %v1849 = vshrl.u32 %v1848, 7
    %v1850 = vadd.s32 %v1849, 120
    %1851 = vset.pattern.permute.xlu0 %v1850
    %1852 = vperm.xlu0 %1851, %v1757
    %v1853 = vpop.permute.xlu0 %1852
    %v1918 = vsub.f32 %v1339, %v1472
    %v1919 = vsub.f32 %v1341, %v1478
    %v1920 = vsub.f32 %v1343, %v1484
    %v1921 = vsub.f32 %v1345, %v1490
    %v1922 = vsub.f32 %v1347, %v1496
    %v1923 = vsub.f32 %v1349, %v1502
    %v1924 = vsub.f32 %v1351, %v1508
    %v1925 = vsub.f32 %v1353, %v1514
    %v1926 = vsub.f32 %v1355, %v1520
    %v1927 = vsub.f32 %v1357, %v1526
    %v1928 = vsub.f32 %v1359, %v1532
    %v1929 = vsub.f32 %v1361, %v1538
    %v1930 = vsub.f32 %v1363, %v1544
    %v1931 = vsub.f32 %v1365, %v1550
    %v1932 = vsub.f32 %v1367, %v1556
    %v1933 = vsub.f32 %v1369, %v1562
    %v1934 = vsub.f32 %v1371, %v1569
    %v1935 = vsub.f32 %v1373, %v1575
    %v1936 = vsub.f32 %v1375, %v1581
    %v1937 = vsub.f32 %v1377, %v1587
    %v1938 = vsub.f32 %v1379, %v1593
    %v1939 = vsub.f32 %v1381, %v1599
    %v1940 = vsub.f32 %v1383, %v1605
    %v1941 = vsub.f32 %v1385, %v1611
    %v1942 = vsub.f32 %v1387, %v1617
    %v1943 = vsub.f32 %v1389, %v1623
    %v1944 = vsub.f32 %v1391, %v1629
    %v1945 = vsub.f32 %v1393, %v1635
    %v1946 = vsub.f32 %v1395, %v1641
    %v1947 = vsub.f32 %v1397, %v1647
    %v1948 = vsub.f32 %v1399, %v1653
    %v1949 = vsub.f32 %v1401, %v1659
    %v1950 = vsub.f32 %v1403, %v1666
    %v1951 = vsub.f32 %v1405, %v1672
    %v1952 = vsub.f32 %v1407, %v1678
    %v1953 = vsub.f32 %v1409, %v1684
    %v1954 = vsub.f32 %v1411, %v1690
    %v1955 = vsub.f32 %v1413, %v1696
    %v1956 = vsub.f32 %v1415, %v1702
    %v1957 = vsub.f32 %v1417, %v1708
    %v1958 = vsub.f32 %v1419, %v1714
    %v1959 = vsub.f32 %v1421, %v1720
    %v1960 = vsub.f32 %v1423, %v1726
    %v1961 = vsub.f32 %v1425, %v1732
    %v1962 = vsub.f32 %v1427, %v1738
    %v1963 = vsub.f32 %v1429, %v1744
    %v1964 = vsub.f32 %v1431, %v1750
    %v1965 = vsub.f32 %v1433, %v1756
    %v1966 = vsub.f32 %v1435, %v1763
    %v1967 = vsub.f32 %v1437, %v1769
    %v1968 = vsub.f32 %v1439, %v1775
    %v1969 = vsub.f32 %v1441, %v1781
    %v1970 = vsub.f32 %v1443, %v1787
    %v1971 = vsub.f32 %v1445, %v1793
    %v1972 = vsub.f32 %v1447, %v1799
    %v1973 = vsub.f32 %v1449, %v1805
    %v1974 = vsub.f32 %v1451, %v1811
    %v1975 = vsub.f32 %v1453, %v1817
    %v1976 = vsub.f32 %v1455, %v1823
    %v1977 = vsub.f32 %v1457, %v1829
    %v1978 = vsub.f32 %v1459, %v1835
    %v1979 = vsub.f32 %v1461, %v1841
    %v1980 = vsub.f32 %v1463, %v1847
    %v1981 = vsub.f32 %v1465, %v1853
    %2046 = vset.pattern.permute.xlu0 0
    %2047 = vperm.xlu0 %2046, %v1918
    %v2048 = vpop.permute.xlu0 %2047
    %2049 = vset.pattern.permute.xlu0 0
    %2050 = vperm.xlu0 %2049, %v1919
    %v2051 = vpop.permute.xlu0 %2050
    %2052 = vset.pattern.permute.xlu0 0
    %2053 = vperm.xlu0 %2052, %v1920
    %v2054 = vpop.permute.xlu0 %2053
    %2055 = vset.pattern.permute.xlu0 0
    %2056 = vperm.xlu0 %2055, %v1921
    %v2057 = vpop.permute.xlu0 %2056
    %2058 = vset.pattern.permute.xlu0 0
    %2059 = vperm.xlu0 %2058, %v1922
    %v2060 = vpop.permute.xlu0 %2059
    %2061 = vset.pattern.permute.xlu0 0
    %2062 = vperm.xlu0 %2061, %v1923
    %v2063 = vpop.permute.xlu0 %2062
    %2064 = vset.pattern.permute.xlu0 0
    %2065 = vperm.xlu0 %2064, %v1924
    %v2066 = vpop.permute.xlu0 %2065
    %2067 = vset.pattern.permute.xlu0 0
    %2068 = vperm.xlu0 %2067, %v1925
    %v2069 = vpop.permute.xlu0 %2068
    %2070 = vset.pattern.permute.xlu0 0
    %2071 = vperm.xlu0 %2070, %v1926
    %v2072 = vpop.permute.xlu0 %2071
    %2073 = vset.pattern.permute.xlu0 0
    %2074 = vperm.xlu0 %2073, %v1927
    %v2075 = vpop.permute.xlu0 %2074
    %2076 = vset.pattern.permute.xlu0 0
    %2077 = vperm.xlu0 %2076, %v1928
    %v2078 = vpop.permute.xlu0 %2077
    %2079 = vset.pattern.permute.xlu0 0
    %2080 = vperm.xlu0 %2079, %v1929
    %v2081 = vpop.permute.xlu0 %2080
    %2082 = vset.pattern.permute.xlu0 0
    %2083 = vperm.xlu0 %2082, %v1930
    %v2084 = vpop.permute.xlu0 %2083
    %2085 = vset.pattern.permute.xlu0 0
    %2086 = vperm.xlu0 %2085, %v1931
    %v2087 = vpop.permute.xlu0 %2086
    %2088 = vset.pattern.permute.xlu0 0
    %2089 = vperm.xlu0 %2088, %v1932
    %v2090 = vpop.permute.xlu0 %2089
    %2091 = vset.pattern.permute.xlu0 0
    %2092 = vperm.xlu0 %2091, %v1933
    %v2093 = vpop.permute.xlu0 %2092
    %2094 = vset.pattern.permute.xlu0 0
    %2095 = vperm.xlu0 %2094, %v1934
    %v2096 = vpop.permute.xlu0 %2095
    %2097 = vset.pattern.permute.xlu0 0
    %2098 = vperm.xlu0 %2097, %v1935
    %v2099 = vpop.permute.xlu0 %2098
    %2100 = vset.pattern.permute.xlu0 0
    %2101 = vperm.xlu0 %2100, %v1936
    %v2102 = vpop.permute.xlu0 %2101
    %2103 = vset.pattern.permute.xlu0 0
    %2104 = vperm.xlu0 %2103, %v1937
    %v2105 = vpop.permute.xlu0 %2104
    %2106 = vset.pattern.permute.xlu0 0
    %2107 = vperm.xlu0 %2106, %v1938
    %v2108 = vpop.permute.xlu0 %2107
    %2109 = vset.pattern.permute.xlu0 0
    %2110 = vperm.xlu0 %2109, %v1939
    %v2111 = vpop.permute.xlu0 %2110
    %2112 = vset.pattern.permute.xlu0 0
    %2113 = vperm.xlu0 %2112, %v1940
    %v2114 = vpop.permute.xlu0 %2113
    %2115 = vset.pattern.permute.xlu0 0
    %2116 = vperm.xlu0 %2115, %v1941
    %v2117 = vpop.permute.xlu0 %2116
    %2118 = vset.pattern.permute.xlu0 0
    %2119 = vperm.xlu0 %2118, %v1942
    %v2120 = vpop.permute.xlu0 %2119
    %2121 = vset.pattern.permute.xlu0 0
    %2122 = vperm.xlu0 %2121, %v1943
    %v2123 = vpop.permute.xlu0 %2122
    %2124 = vset.pattern.permute.xlu0 0
    %2125 = vperm.xlu0 %2124, %v1944
    %v2126 = vpop.permute.xlu0 %2125
    %2127 = vset.pattern.permute.xlu0 0
    %2128 = vperm.xlu0 %2127, %v1945
    %v2129 = vpop.permute.xlu0 %2128
    %2130 = vset.pattern.permute.xlu0 0
    %2131 = vperm.xlu0 %2130, %v1946
    %v2132 = vpop.permute.xlu0 %2131
    %2133 = vset.pattern.permute.xlu0 0
    %2134 = vperm.xlu0 %2133, %v1947
    %v2135 = vpop.permute.xlu0 %2134
    %2136 = vset.pattern.permute.xlu0 0
    %2137 = vperm.xlu0 %2136, %v1948
    %v2138 = vpop.permute.xlu0 %2137
    %2139 = vset.pattern.permute.xlu0 0
    %2140 = vperm.xlu0 %2139, %v1949
    %v2141 = vpop.permute.xlu0 %2140
    %2142 = vset.pattern.permute.xlu0 0
    %2143 = vperm.xlu0 %2142, %v1950
    %v2144 = vpop.permute.xlu0 %2143
    %2145 = vset.pattern.permute.xlu0 0
    %2146 = vperm.xlu0 %2145, %v1951
    %v2147 = vpop.permute.xlu0 %2146
    %2148 = vset.pattern.permute.xlu0 0
    %2149 = vperm.xlu0 %2148, %v1952
    %v2150 = vpop.permute.xlu0 %2149
    %2151 = vset.pattern.permute.xlu0 0
    %2152 = vperm.xlu0 %2151, %v1953
    %v2153 = vpop.permute.xlu0 %2152
    %2154 = vset.pattern.permute.xlu0 0
    %2155 = vperm.xlu0 %2154, %v1954
    %v2156 = vpop.permute.xlu0 %2155
    %2157 = vset.pattern.permute.xlu0 0
    %2158 = vperm.xlu0 %2157, %v1955
    %v2159 = vpop.permute.xlu0 %2158
    %2160 = vset.pattern.permute.xlu0 0
    %2161 = vperm.xlu0 %2160, %v1956
    %v2162 = vpop.permute.xlu0 %2161
    %2163 = vset.pattern.permute.xlu0 0
    %2164 = vperm.xlu0 %2163, %v1957
    %v2165 = vpop.permute.xlu0 %2164
    %2166 = vset.pattern.permute.xlu0 0
    %2167 = vperm.xlu0 %2166, %v1958
    %v2168 = vpop.permute.xlu0 %2167
    %2169 = vset.pattern.permute.xlu0 0
    %2170 = vperm.xlu0 %2169, %v1959
    %v2171 = vpop.permute.xlu0 %2170
    %2172 = vset.pattern.permute.xlu0 0
    %2173 = vperm.xlu0 %2172, %v1960
    %v2174 = vpop.permute.xlu0 %2173
    %2175 = vset.pattern.permute.xlu0 0
    %2176 = vperm.xlu0 %2175, %v1961
    %v2177 = vpop.permute.xlu0 %2176
    %2178 = vset.pattern.permute.xlu0 0
    %2179 = vperm.xlu0 %2178, %v1962
    %v2180 = vpop.permute.xlu0 %2179
    %2181 = vset.pattern.permute.xlu0 0
    %2182 = vperm.xlu0 %2181, %v1963
    %v2183 = vpop.permute.xlu0 %2182
    %2184 = vset.pattern.permute.xlu0 0
    %2185 = vperm.xlu0 %2184, %v1964
    %v2186 = vpop.permute.xlu0 %2185
    %2187 = vset.pattern.permute.xlu0 0
    %2188 = vperm.xlu0 %2187, %v1965
    %v2189 = vpop.permute.xlu0 %2188
    %2190 = vset.pattern.permute.xlu0 0
    %2191 = vperm.xlu0 %2190, %v1966
    %v2192 = vpop.permute.xlu0 %2191
    %2193 = vset.pattern.permute.xlu0 0
    %2194 = vperm.xlu0 %2193, %v1967
    %v2195 = vpop.permute.xlu0 %2194
    %2196 = vset.pattern.permute.xlu0 0
    %2197 = vperm.xlu0 %2196, %v1968
    %v2198 = vpop.permute.xlu0 %2197
    %2199 = vset.pattern.permute.xlu0 0
    %2200 = vperm.xlu0 %2199, %v1969
    %v2201 = vpop.permute.xlu0 %2200
    %2202 = vset.pattern.permute.xlu0 0
    %2203 = vperm.xlu0 %2202, %v1970
    %v2204 = vpop.permute.xlu0 %2203
    %2205 = vset.pattern.permute.xlu0 0
    %2206 = vperm.xlu0 %2205, %v1971
    %v2207 = vpop.permute.xlu0 %2206
    %2208 = vset.pattern.permute.xlu0 0
    %2209 = vperm.xlu0 %2208, %v1972
    %v2210 = vpop.permute.xlu0 %2209
    %2211 = vset.pattern.permute.xlu0 0
    %2212 = vperm.xlu0 %2211, %v1973
    %v2213 = vpop.permute.xlu0 %2212
    %2214 = vset.pattern.permute.xlu0 0
    %2215 = vperm.xlu0 %2214, %v1974
    %v2216 = vpop.permute.xlu0 %2215
    %2217 = vset.pattern.permute.xlu0 0
    %2218 = vperm.xlu0 %2217, %v1975
    %v2219 = vpop.permute.xlu0 %2218
    %2220 = vset.pattern.permute.xlu0 0
    %2221 = vperm.xlu0 %2220, %v1976
    %v2222 = vpop.permute.xlu0 %2221
    %2223 = vset.pattern.permute.xlu0 0
    %2224 = vperm.xlu0 %2223, %v1977
    %v2225 = vpop.permute.xlu0 %2224
    %2226 = vset.pattern.permute.xlu0 0
    %2227 = vperm.xlu0 %2226, %v1978
    %v2228 = vpop.permute.xlu0 %2227
    %2229 = vset.pattern.permute.xlu0 0
    %2230 = vperm.xlu0 %2229, %v1979
    %v2231 = vpop.permute.xlu0 %2230
    %2232 = vset.pattern.permute.xlu0 0
    %2233 = vperm.xlu0 %2232, %v1980
    %v2234 = vpop.permute.xlu0 %2233
    %2235 = vset.pattern.permute.xlu0 0
    %2236 = vperm.xlu0 %2235, %v1981
    %v2237 = vpop.permute.xlu0 %2236
    %v2238 = vperm.slane %v2048, %v1107
    %v2239 = vperm.slane %v2051, %v1109
    %v2240 = vsel %vm1111, %v2239, %v2238
    %v2241 = vperm.slane %v2054, %v1113
    %v2242 = vsel %vm1115, %v2241, %v2240
    %v2243 = vperm.slane %v2057, %v1117
    %v2244 = vsel %vm1119, %v2243, %v2242
    %v2245 = vperm.slane %v2060, %v1121
    %v2246 = vsel %vm1123, %v2245, %v2244
    %v2247 = vperm.slane %v2063, %v1125
    %v2248 = vsel %vm1127, %v2247, %v2246
    %v2249 = vperm.slane %v2066, %v1129
    %v2250 = vsel %vm1131, %v2249, %v2248
    %v2251 = vperm.slane %v2069, %v1133
    %v2252 = vsel %vm1135, %v2251, %v2250
    %v2253 = vperm.slane %v2072, %v1137
    %v2254 = vsel %vm1139, %v2253, %v2252
    %v2255 = vperm.slane %v2075, %v1141
    %v2256 = vsel %vm1143, %v2255, %v2254
    %v2257 = vperm.slane %v2078, %v1145
    %v2258 = vsel %vm1147, %v2257, %v2256
    %v2259 = vperm.slane %v2081, %v1149
    %v2260 = vsel %vm1151, %v2259, %v2258
    %v2261 = vperm.slane %v2084, %v1153
    %v2262 = vsel %vm1155, %v2261, %v2260
    %v2263 = vperm.slane %v2087, %v1157
    %v2264 = vsel %vm1159, %v2263, %v2262
    %v2265 = vperm.slane %v2090, %v1161
    %v2266 = vsel %vm1163, %v2265, %v2264
    %v2267 = vperm.slane %v2093, %v1165
    %v2268 = vsel %vm1167, %v2267, %v2266
    %v2269 = vperm.slane %v2096, %v1107
    %v2270 = vperm.slane %v2099, %v1109
    %v2271 = vsel %vm1111, %v2270, %v2269
    %v2272 = vperm.slane %v2102, %v1113
    %v2273 = vsel %vm1115, %v2272, %v2271
    %v2274 = vperm.slane %v2105, %v1117
    %v2275 = vsel %vm1119, %v2274, %v2273
    %v2276 = vperm.slane %v2108, %v1121
    %v2277 = vsel %vm1123, %v2276, %v2275
    %v2278 = vperm.slane %v2111, %v1125
    %v2279 = vsel %vm1127, %v2278, %v2277
    %v2280 = vperm.slane %v2114, %v1129
    %v2281 = vsel %vm1131, %v2280, %v2279
    %v2282 = vperm.slane %v2117, %v1133
    %v2283 = vsel %vm1135, %v2282, %v2281
    %v2284 = vperm.slane %v2120, %v1137
    %v2285 = vsel %vm1139, %v2284, %v2283
    %v2286 = vperm.slane %v2123, %v1141
    %v2287 = vsel %vm1143, %v2286, %v2285
    %v2288 = vperm.slane %v2126, %v1145
    %v2289 = vsel %vm1147, %v2288, %v2287
    %v2290 = vperm.slane %v2129, %v1149
    %v2291 = vsel %vm1151, %v2290, %v2289
    %v2292 = vperm.slane %v2132, %v1153
    %v2293 = vsel %vm1155, %v2292, %v2291
    %v2294 = vperm.slane %v2135, %v1157
    %v2295 = vsel %vm1159, %v2294, %v2293
    %v2296 = vperm.slane %v2138, %v1161
    %v2297 = vsel %vm1163, %v2296, %v2295
    %v2298 = vperm.slane %v2141, %v1165
    %v2299 = vsel %vm1167, %v2298, %v2297
    %v2300 = vperm.slane %v2144, %v1107
    %v2301 = vperm.slane %v2147, %v1109
    %v2302 = vsel %vm1111, %v2301, %v2300
    %v2303 = vperm.slane %v2150, %v1113
    %v2304 = vsel %vm1115, %v2303, %v2302
    %v2305 = vperm.slane %v2153, %v1117
    %v2306 = vsel %vm1119, %v2305, %v2304
    %v2307 = vperm.slane %v2156, %v1121
    %v2308 = vsel %vm1123, %v2307, %v2306
    %v2309 = vperm.slane %v2159, %v1125
    %v2310 = vsel %vm1127, %v2309, %v2308
    %v2311 = vperm.slane %v2162, %v1129
    %v2312 = vsel %vm1131, %v2311, %v2310
    %v2313 = vperm.slane %v2165, %v1133
    %v2314 = vsel %vm1135, %v2313, %v2312
    %v2315 = vperm.slane %v2168, %v1137
    %v2316 = vsel %vm1139, %v2315, %v2314
    %v2317 = vperm.slane %v2171, %v1141
    %v2318 = vsel %vm1143, %v2317, %v2316
    %v2319 = vperm.slane %v2174, %v1145
    %v2320 = vsel %vm1147, %v2319, %v2318
    %v2321 = vperm.slane %v2177, %v1149
    %v2322 = vsel %vm1151, %v2321, %v2320
    %v2323 = vperm.slane %v2180, %v1153
    %v2324 = vsel %vm1155, %v2323, %v2322
    %v2325 = vperm.slane %v2183, %v1157
    %v2326 = vsel %vm1159, %v2325, %v2324
    %v2327 = vperm.slane %v2186, %v1161
    %v2328 = vsel %vm1163, %v2327, %v2326
    %v2329 = vperm.slane %v2189, %v1165
    %v2330 = vsel %vm1167, %v2329, %v2328
    %v2331 = vperm.slane %v2192, %v1107
    %v2332 = vperm.slane %v2195, %v1109
    %v2333 = vsel %vm1111, %v2332, %v2331
    %v2334 = vperm.slane %v2198, %v1113
    %v2335 = vsel %vm1115, %v2334, %v2333
    %v2336 = vperm.slane %v2201, %v1117
    %v2337 = vsel %vm1119, %v2336, %v2335
    %v2338 = vperm.slane %v2204, %v1121
    %v2339 = vsel %vm1123, %v2338, %v2337
    %v2340 = vperm.slane %v2207, %v1125
    %v2341 = vsel %vm1127, %v2340, %v2339
    %v2342 = vperm.slane %v2210, %v1129
    %v2343 = vsel %vm1131, %v2342, %v2341
    %v2344 = vperm.slane %v2213, %v1133
    %v2345 = vsel %vm1135, %v2344, %v2343
    %v2346 = vperm.slane %v2216, %v1137
    %v2347 = vsel %vm1139, %v2346, %v2345
    %v2348 = vperm.slane %v2219, %v1141
    %v2349 = vsel %vm1143, %v2348, %v2347
    %v2350 = vperm.slane %v2222, %v1145
    %v2351 = vsel %vm1147, %v2350, %v2349
    %v2352 = vperm.slane %v2225, %v1149
    %v2353 = vsel %vm1151, %v2352, %v2351
    %v2354 = vperm.slane %v2228, %v1153
    %v2355 = vsel %vm1155, %v2354, %v2353
    %v2356 = vperm.slane %v2231, %v1157
    %v2357 = vsel %vm1159, %v2356, %v2355
    %v2358 = vperm.slane %v2234, %v1161
    %v2359 = vsel %vm1163, %v2358, %v2357
    %v2360 = vperm.slane %v2237, %v1165
    %v2361 = vsel %vm1167, %v2360, %v2359
    %2366 = vst [vmem:[#allocation8 + $0x1] sm:$0x1] %v2268
    %2367 = vst [vmem:[#allocation8 + $0x3] sm:$0x1] %v2299
    %2368 = vst [vmem:[#allocation8 + $0x5] sm:$0x1] %v2330
    %2369 = vst [vmem:[#allocation8 + $0x7] sm:$0x1] %v2361
    // Predicated region
    $region26: #{_displacement_pallas.1} parent=1 // pred_check
      _
    $region27: #{_displacement_pallas.1} parent=1 // pred_check_branch
      %2371 = sbr.rel (0) target = $region29
    $region28: #{_displacement_pallas.1} parent=1 // pred_region
      %2373 = vsyncadd [#allocation4], 0
      %s2374 = sshll.u32 [#allocation8], 4
      %s2375 = int_to_ptr.vmem [resolvable:$true] %s2374
      %s2376 = sshll.u32 %s3, 4
      %s2377 = int_to_ptr.hbm [resolvable:$true] %s2376
      %2382 = dma.vmem_to_hbm [thread:$0]  %s2375, 128, %s2377, [#allocation4], 32, 32, 2
    $region29: #{_displacement_pallas.1} parent=1 // pred_fallthru
      _
    // Predicated region
    $region30: #{_displacement_pallas.1} parent=1 // pred_check
      _
    $region31: #{_displacement_pallas.1} parent=1 // pred_check_branch
      %2384 = sbr.rel (0) target = $region33
    $region32: #{_displacement_pallas.1} parent=1 // pred_region
      %2386 = dma.done [#allocation4], 128
    $region33: #{_displacement_pallas.1} parent=1 // pred_fallthru
      _
    %2387 = vsyncpa [#allocation3], 1
    %2388 = vsyncpa [#allocation6], 1
    %2389 = vsyncpa [#allocation4], 1

</llo_original>
